<compile_context>
chip_gen: v6e
topology: v6e:2x2x1
jax: 0.10.0
libtpu: 0.0.40
codegen_flags: <defaults>
</compile_context>

<pallas_src>
import numpy as np
import jax
import jax.numpy as jnp
from jax import lax
from jax.experimental import pallas as pl
from jax.experimental.pallas import tpu as pltpu

N, M = 4, 4            # graph is an N*M-node structure; fc1 in_features = N*M
NODES = N * M
MAX_DEG = 2
F1 = 10                # hidden complex feature width
N_CLASSES = 2
THETA_D = 0.25


# ---------------------------------------------------------------------------
# Laplacian construction (host-side numpy, mirrors GCN.__init__)
# ---------------------------------------------------------------------------
def get_adjacency(n, theta):
    # TODO(synk): original get_adjacency / theta_d were not provided; a
    # deterministic magnetic ring adjacency (symmetric magnitude, phase
    # exp(i*theta*(i-j))) is used instead.
    a_real = np.zeros((n, n))
    for i in range(n):
        a_real[i, (i + 1) % n] = 1.0
        a_real[(i + 1) % n, i] = 1.0
    phase = np.exp(1j * theta * (np.arange(n)[:, None] - np.arange(n)[None, :]))
    return a_real * phase


def build_laplacian(n, theta):
    A = get_adjacency(n, theta)
    I = np.eye(n) + 1j * np.eye(n)
    A_h = A + I
    dii = np.sum(np.abs(A_h), axis=1)
    D_inv_h = np.diag(dii ** (-0.5))
    L = D_inv_h @ (A_h @ D_inv_h)
    return np.real(L).astype(np.float32), np.imag(L).astype(np.float32)


# ---------------------------------------------------------------------------
# Fused forward kernel. Activations are (2n, lanes) stacked [real; imag],
# batch in lanes.  All heavy lifting is MXU matmuls; exp/log/sqrt go to EUP.
# ---------------------------------------------------------------------------
def _gcn_fused_kernel(xs_ref, ll_ref, w1_ref, b1_ref, w2_ref, b2_ref,
                      wfc_ref, bfc_ref, out_ref):
    f32 = jnp.float32
    cdt = ll_ref.dtype                         # MXU operand dtype (f32 or bf16)
    n2 = 2 * NODES

    LL = ll_ref[...]                           # (2n, 2n) real 2x2-block Laplacian
    W1 = w1_ref[...]                           # (2*F1*n, 2*K*n) Kronecker weights
    B1 = b1_ref[...]                           # (2*F1*n, 1)  sum_k bias, layer 1
    W2 = w2_ref[...]                           # (2*K*n, 2*F1*n)
    B2 = b2_ref[...]                           # (2n, 1)      sum_k bias, layer 2
    WF = wfc_ref[...]                          # (2, n)       head weight (transposed)
    BF = bfc_ref[...]                          # (2, 1)       head bias

    tb = xs_ref.shape[-1]                      # static block lane width
    sub = 256 if (tb % 256 == 0 and tb > 128) else min(tb, 128)
    n_sub = tb // sub

    def compute_tile(xs):
        # --- layer-1 Laplacian powers: one matmul per complex L apply -------
        lx0 = jnp.dot(LL, xs, preferred_element_type=f32)              # L   x
        lx1 = jnp.dot(LL, lx0.astype(cdt), preferred_element_type=f32) # L^2 x
        lx = jnp.concatenate([lx0, lx1], axis=0).astype(cdt)           # (4n, sub)

        # --- layer-1 complex 1->10 mixing (both degrees) as one matmul ------
        z1 = jnp.dot(W1, lx, preferred_element_type=f32) + B1          # (2*F1*n, sub)
        # TODO(synk): complex_relu not provided; CReLU assumed (independent
        # relu on real and imaginary parts).
        z1 = jnp.maximum(z1, 0.0)

        # --- layer-2 complex 10->1 contraction (both degrees) ---------------
        y = jnp.dot(W2, z1.astype(cdt), preferred_element_type=f32)    # (4n, sub)

        # --- layer-2 Laplacian, Horner-factored: L*(y0 + L*y1) + sum_k b2 ---
        t = y[:n2, :] + jnp.dot(LL, y[n2:, :].astype(cdt),
                                preferred_element_type=f32)
        z2 = jnp.dot(LL, t.astype(cdt), preferred_element_type=f32) + B2
        z2 = jnp.maximum(z2, 0.0)                                       # CReLU

        # --- head: |z| -> Linear(n, 2) -> relu -> log_softmax ---------------
        zr = z2[:NODES, :]
        zi = z2[NODES:, :]
        mag = jnp.sqrt(zr * zr + zi * zi)                               # (n, sub)
        logits = jnp.dot(WF, mag.astype(cdt),
                         preferred_element_type=f32) + BF               # (2, sub)
        logits = jnp.maximum(logits, 0.0)
        mx = jnp.max(logits, axis=0, keepdims=True)
        sh = logits - mx
        lse = jnp.log(jnp.sum(jnp.exp(sh), axis=0, keepdims=True))
        return sh - lse

    if n_sub == 1:
        out_ref[...] = compute_tile(xs_ref[...])
    else:
        # Big DMA tile, small compute sub-tiles: bounds live vreg/VMEM working
        # set while still amortizing per-grid-step pipeline overhead.
        def body(j, carry):
            c0 = pl.multiple_of(j * sub, sub)
            out_ref[:, pl.ds(c0, sub)] = compute_tile(xs_ref[:, pl.ds(c0, sub)])
            return carry
        lax.fori_loop(0, n_sub, body, 0)


# ---------------------------------------------------------------------------
# Wrapper
# ---------------------------------------------------------------------------
def _pick_batch_tile(B):
    # Lane-dense tiles (multiple of 128), big enough to amortize the ~0.35us
    # per-grid-step overhead, small enough to keep >=4 parallel grid steps so
    # both v7x TensorCores (and megacore) get work.
    if B <= 256:
        return 128
    tb = 128
    while tb < 1024 and B >= 8 * tb:
        tb *= 2
    return tb


def _prepare_operands(params, mxu_dtype):
    """Builds the stacked real-block Laplacian and Kronecker-expanded weights."""
    f32 = jnp.float32
    Lr = params["Lr"].astype(f32)
    Li = params["Li"].astype(f32)
    LL = jnp.block([[Lr, -Li], [Li, Lr]])                       # (2n, 2n)

    w1r, w1i = params["W1r"], params["W1i"]                     # (K, F1)
    w2r, w2i = params["W2r"], params["W2i"]                     # (K, F1)
    I = jnp.eye(NODES, dtype=f32)

    # W1_big[(f,a,n),(k,b,m)] = M1[f,a,k,b] * delta(n,m), a/b in {real, imag}
    M1 = jnp.stack([jnp.stack([w1r.T, -w1i.T], axis=-1),
                    jnp.stack([w1i.T,  w1r.T], axis=-1)], axis=1)   # (F1,2,K,2)
    W1_big = jnp.einsum('fakb,nm->fankbm', M1, I).reshape(
        2 * F1 * NODES, 2 * MAX_DEG * NODES)                         # (320, 64)

    # W2_big[(k,b,n),(f,a,m)] = M2[k,b,f,a] * delta(n,m)
    M2 = jnp.stack([jnp.stack([w2r, -w2i], axis=-1),
                    jnp.stack([w2i,  w2r], axis=-1)], axis=1)        # (K,2,F1,2)
    W2_big = jnp.einsum('kbfa,nm->kbnfam', M2, I).reshape(
        2 * MAX_DEG * NODES, 2 * F1 * NODES)                         # (64, 320)

    # Per-degree biases pre-summed over k.
    b1s = jnp.stack([jnp.sum(params["b1r"], axis=0),
                     jnp.sum(params["b1i"], axis=0)], axis=1)        # (F1, 2)
    b1_stk = jnp.broadcast_to(b1s[:, :, None], (F1, 2, NODES)).reshape(
        2 * F1 * NODES, 1)

    b2s = jnp.stack([jnp.sum(params["b2r"]), jnp.sum(params["b2i"])])
    b2_stk = jnp.broadcast_to(b2s[:, None, None], (2, NODES, 1)).reshape(
        2 * NODES, 1)

    wfc_t = params["Wfc"].T.astype(f32)                              # (2, n)
    bfc = params["bfc"].astype(f32)                                  # (2, 1)

    return (LL.astype(mxu_dtype), W1_big.astype(mxu_dtype),
            b1_stk.astype(f32), W2_big.astype(mxu_dtype),
            b2_stk.astype(f32), wfc_t.astype(mxu_dtype), bfc.astype(f32))


def gcn_forward(xr, xi, params, *, batch_tile=None, mxu_bf16=False):
    B, n = xr.shape
    assert n == NODES
    mxu_dtype = jnp.bfloat16 if mxu_bf16 else jnp.float32

    TB = batch_tile if batch_tile is not None else _pick_batch_tile(B)
    assert TB % 128 == 0, TB
    Bp = ((B + TB - 1) // TB) * TB                   # pad batch (lane-aligned)

    # node-major / batch-in-lanes, real stacked over imag (layout plumbing)
    xs = jnp.concatenate([jnp.transpose(xr), jnp.transpose(xi)],
                         axis=0).astype(mxu_dtype)   # (2n, B)
    if Bp != B:
        xs = jnp.pad(xs, ((0, 0), (0, Bp - B)))

    LL, W1, b1, W2, b2, wfc_t, bfc = _prepare_operands(params, mxu_dtype)

    def full(shape):
        return pl.BlockSpec(shape, lambda i: (0, 0))

    spec_x = pl.BlockSpec((2 * NODES, TB), lambda i: (0, i))
    spec_o = pl.BlockSpec((N_CLASSES, TB), lambda i: (0, i))

    out_t = pl.pallas_call(
        _gcn_fused_kernel,
        out_shape=jax.ShapeDtypeStruct((N_CLASSES, Bp), jnp.float32),
        grid_spec=pltpu.PrefetchScalarGridSpec(
            num_scalar_prefetch=0,
            grid=(Bp // TB,),
            in_specs=[spec_x,
                      full((2 * NODES, 2 * NODES)),
                      full((2 * F1 * NODES, 2 * MAX_DEG * NODES)),
                      full((2 * F1 * NODES, 1)),
                      full((2 * MAX_DEG * NODES, 2 * F1 * NODES)),
                      full((2 * NODES, 1)),
                      full((N_CLASSES, NODES)),
                      full((N_CLASSES, 1))],
            out_specs=spec_o,
        ),
        compiler_params=pltpu.CompilerParams(
            dimension_semantics=("parallel",)),
    )(xs, LL, W1, b1, W2, b2, wfc_t, bfc)
    return jnp.transpose(out_t[:, :B])               # (B, N_CLASSES)


# ---------------------------------------------------------------------------
# Parameters
# ---------------------------------------------------------------------------
def init_params(key):
    ks = jax.random.split(key, 10)
    s = 0.25
    # TODO(synk): ComplexLinear definition not provided; standard complex
    # linear (separate real/imag weight & bias per degree) assumed.
    params = {
        "W1r": s * jax.random.normal(ks[0], (MAX_DEG, F1), jnp.float32),
        "W1i": s * jax.random.normal(ks[1], (MAX_DEG, F1), jnp.float32),
        "b1r": s * jax.random.normal(ks[2], (MAX_DEG, F1), jnp.float32),
        "b1i": s * jax.random.normal(ks[3], (MAX_DEG, F1), jnp.float32),
        "W2r": s * jax.random.normal(ks[4], (MAX_DEG, F1), jnp.float32),
        "W2i": s * jax.random.normal(ks[5], (MAX_DEG, F1), jnp.float32),
        "b2r": s * jax.random.normal(ks[6], (MAX_DEG, 1), jnp.float32),
        "b2i": s * jax.random.normal(ks[7], (MAX_DEG, 1), jnp.float32),
        "Wfc": s * jax.random.normal(ks[8], (NODES, N_CLASSES), jnp.float32),
        "bfc": s * jax.random.normal(ks[9], (N_CLASSES, 1), jnp.float32),
    }
    Lr, Li = build_laplacian(NODES, THETA_D)
    params["Lr"] = jnp.asarray(Lr)
    params["Li"] = jnp.asarray(Li)
    return params


# ---------------------------------------------------------------------------
# float64 numpy reference (literal transcription of the PyTorch module)
# ---------------------------------------------------------------------------
def _crelu(z):
    return np.maximum(z.real, 0.0) + 1j * np.maximum(z.imag, 0.0)


def gcn_reference(xr, xi, params):
    p = {k: np.asarray(v, np.float64) for k, v in params.items()}
    L = p["Lr"] + 1j * p["Li"]
    laps = [L]
    for _ in range(MAX_DEG - 1):
        laps.append(laps[-1] @ L)
    B = xr.shape[0]
    X = (np.asarray(xr, np.float64) + 1j * np.asarray(xi, np.float64))[:, :, None]

    Z1 = np.zeros((B, NODES, F1), np.complex128)
    for k in range(MAX_DEG):
        W = (p["W1r"][k] + 1j * p["W1i"][k]).reshape(1, F1)
        b = (p["b1r"][k] + 1j * p["b1i"][k]).reshape(1, 1, F1)
        LX = np.einsum('nm,bmf->bnf', laps[k], X)
        Z1 = Z1 + LX @ W + b
    Z1 = _crelu(Z1)

    Z2 = np.zeros((B, NODES, 1), np.complex128)
    for k in range(MAX_DEG):
        W = (p["W2r"][k] + 1j * p["W2i"][k]).reshape(F1, 1)
        b = (p["b2r"][k] + 1j * p["b2i"][k]).reshape(1, 1, 1)
        LZ = np.einsum('nm,bmf->bnf', laps[k], Z1)
        Z2 = Z2 + LZ @ W + b
    Z2 = _crelu(Z2)

    mag = np.abs(Z2)[:, :, 0]                                   # (B, n)
    logits = np.maximum(mag @ p["Wfc"] + p["bfc"].reshape(1, N_CLASSES), 0.0)
    sh = logits - logits.max(axis=1, keepdims=True)
    return sh - np.log(np.exp(sh).sum(axis=1, keepdims=True))


if __name__ == "__main__":
    key = jax.random.PRNGKey(0)
    k_in_r, k_in_i, k_par = jax.random.split(key, 3)
    params = init_params(k_par)

    fwd = jax.jit(gcn_forward, static_argnames=("batch_tile", "mxu_bf16"))

    # Small-batch check (matches the module's natural tiny shapes).
    B = 2
    xr = jax.random.normal(k_in_r, (B, NODES), dtype=jnp.float32)
    xi = jax.random.normal(k_in_i, (B, NODES), dtype=jnp.float32)
    out = jax.block_until_ready(fwd(xr, xi, params))
    assert out.shape == (B, N_CLASSES)
    ref = gcn_reference(xr, xi, params)
    np.testing.assert_allclose(np.asarray(out), ref, rtol=5e-2, atol=5e-2)

    # Second check: ragged batch + explicit large tile exercises the batch
    # padding path and the in-kernel lane sub-tile loop.
    B2 = 500
    xr2 = jax.random.normal(jax.random.PRNGKey(1), (B2, NODES), dtype=jnp.float32)
    xi2 = jax.random.normal(jax.random.PRNGKey(2), (B2, NODES), dtype=jnp.float32)
    out2 = jax.block_until_ready(fwd(xr2, xi2, params, batch_tile=512))
    assert out2.shape == (B2, N_CLASSES)
    ref2 = gcn_reference(xr2, xi2, params)
    np.testing.assert_allclose(np.asarray(out2), ref2, rtol=5e-2, atol=5e-2)

    print("KERNEL_OK")
</pallas_src>

<mosaic_0001>
module attributes {stable_mosaic.version = 11 : i64} {
  func.func @_gcn_fused_kernel(%arg0: i32, %arg1: memref<32x128xf32, #tpu.memory_space<vmem>>, %arg2: memref<32x32xf32, #tpu.memory_space<vmem>>, %arg3: memref<320x64xf32, #tpu.memory_space<vmem>>, %arg4: memref<320x1xf32, #tpu.memory_space<vmem>>, %arg5: memref<64x320xf32, #tpu.memory_space<vmem>>, %arg6: memref<32x1xf32, #tpu.memory_space<vmem>>, %arg7: memref<2x16xf32, #tpu.memory_space<vmem>>, %arg8: memref<2x1xf32, #tpu.memory_space<vmem>>, %arg9: memref<2x128xf32, #tpu.memory_space<vmem>>) attributes {dimension_semantics = [#tpu.dimension_semantics<parallel>], iteration_bounds = array<i64: 1>, scalar_prefetch = 0 : i64, scratch_operands = 0 : i64, tpu.core_type = #tpu.core_type<tc>, window_params = [{transform_indices = @transform_0, window_bounds = array<i64: 32, 128>}, {pipeline_mode = #tpu.pipeline_mode<synchronous>, transform_indices = @transform_1, window_bounds = array<i64: 32, 32>}, {pipeline_mode = #tpu.pipeline_mode<synchronous>, transform_indices = @transform_2, window_bounds = array<i64: 320, 64>}, {pipeline_mode = #tpu.pipeline_mode<synchronous>, transform_indices = @transform_3, window_bounds = array<i64: 320, 1>}, {pipeline_mode = #tpu.pipeline_mode<synchronous>, transform_indices = @transform_4, window_bounds = array<i64: 64, 320>}, {pipeline_mode = #tpu.pipeline_mode<synchronous>, transform_indices = @transform_5, window_bounds = array<i64: 32, 1>}, {pipeline_mode = #tpu.pipeline_mode<synchronous>, transform_indices = @transform_6, window_bounds = array<i64: 2, 16>}, {pipeline_mode = #tpu.pipeline_mode<synchronous>, transform_indices = @transform_7, window_bounds = array<i64: 2, 1>}, {transform_indices = @transform_8, window_bounds = array<i64: 2, 128>}]} {
    %c0 = arith.constant 0 : index
    %c0_0 = arith.constant 0 : index
    %0 = vector.load %arg2[%c0, %c0_0] : memref<32x32xf32, #tpu.memory_space<vmem>>, vector<32x32xf32>
    %c0_1 = arith.constant 0 : index
    %c0_2 = arith.constant 0 : index
    %1 = vector.load %arg3[%c0_1, %c0_2] : memref<320x64xf32, #tpu.memory_space<vmem>>, vector<320x64xf32>
    %c0_3 = arith.constant 0 : index
    %c0_4 = arith.constant 0 : index
    %2 = vector.load %arg4[%c0_3, %c0_4] : memref<320x1xf32, #tpu.memory_space<vmem>>, vector<320x1xf32>
    %c0_5 = arith.constant 0 : index
    %c0_6 = arith.constant 0 : index
    %3 = vector.load %arg5[%c0_5, %c0_6] : memref<64x320xf32, #tpu.memory_space<vmem>>, vector<64x320xf32>
    %c0_7 = arith.constant 0 : index
    %c0_8 = arith.constant 0 : index
    %4 = vector.load %arg6[%c0_7, %c0_8] : memref<32x1xf32, #tpu.memory_space<vmem>>, vector<32x1xf32>
    %c0_9 = arith.constant 0 : index
    %c0_10 = arith.constant 0 : index
    %5 = vector.load %arg7[%c0_9, %c0_10] : memref<2x16xf32, #tpu.memory_space<vmem>>, vector<2x16xf32>
    %c0_11 = arith.constant 0 : index
    %c0_12 = arith.constant 0 : index
    %6 = vector.load %arg8[%c0_11, %c0_12] : memref<2x1xf32, #tpu.memory_space<vmem>>, vector<2x1xf32>
    %c0_13 = arith.constant 0 : index
    %c0_14 = arith.constant 0 : index
    %7 = vector.load %arg1[%c0_13, %c0_14] : memref<32x128xf32, #tpu.memory_space<vmem>>, vector<32x128xf32>
    %cst = arith.constant dense<0.000000e+00> : vector<32x128xf32>
    %8 = tpu.matmul %0, %7, %cst {dimension_numbers = #tpu.dot_dimension_numbers<[1], [0], [0], [1], [0, 0, 1, 1], [], []>} : vector<32x32xf32>, vector<32x128xf32>, vector<32x128xf32> -> vector<32x128xf32>
    %cst_15 = arith.constant dense<0.000000e+00> : vector<32x128xf32>
    %9 = tpu.matmul %0, %8, %cst_15 {dimension_numbers = #tpu.dot_dimension_numbers<[1], [0], [0], [1], [0, 0, 1, 1], [], []>} : vector<32x32xf32>, vector<32x128xf32>, vector<32x128xf32> -> vector<32x128xf32>
    %10 = tpu.concatenate %8, %9 in 0 : vector<32x128xf32>, vector<32x128xf32> -> vector<64x128xf32>
    %cst_16 = arith.constant dense<0.000000e+00> : vector<320x128xf32>
    %11 = tpu.matmul %1, %10, %cst_16 {dimension_numbers = #tpu.dot_dimension_numbers<[1], [0], [0], [1], [0, 0, 1, 1], [], []>} : vector<320x64xf32>, vector<64x128xf32>, vector<320x128xf32> -> vector<320x128xf32>
    %12 = vector.broadcast %2 : vector<320x1xf32> to vector<320x128xf32>
    %13 = arith.addf %11, %12 : vector<320x128xf32>
    %cst_17 = arith.constant 0.000000e+00 : f32
    %14 = vector.broadcast %cst_17 : f32 to vector<320x128xf32>
    %15 = arith.maximumf %13, %14 : vector<320x128xf32>
    %cst_18 = arith.constant dense<0.000000e+00> : vector<64x128xf32>
    %16 = tpu.matmul %3, %15, %cst_18 {dimension_numbers = #tpu.dot_dimension_numbers<[1], [0], [0], [1], [0, 0, 1, 1], [], []>} : vector<64x320xf32>, vector<320x128xf32>, vector<64x128xf32> -> vector<64x128xf32>
    %17 = vector.extract_strided_slice %16 {offsets = [0, 0], sizes = [32, 128], strides = [1, 1]} : vector<64x128xf32> to vector<32x128xf32>
    %18 = vector.extract_strided_slice %16 {offsets = [32, 0], sizes = [32, 128], strides = [1, 1]} : vector<64x128xf32> to vector<32x128xf32>
    %cst_19 = arith.constant dense<0.000000e+00> : vector<32x128xf32>
    %19 = tpu.matmul %0, %18, %cst_19 {dimension_numbers = #tpu.dot_dimension_numbers<[1], [0], [0], [1], [0, 0, 1, 1], [], []>} : vector<32x32xf32>, vector<32x128xf32>, vector<32x128xf32> -> vector<32x128xf32>
    %20 = arith.addf %17, %19 : vector<32x128xf32>
    %cst_20 = arith.constant dense<0.000000e+00> : vector<32x128xf32>
    %21 = tpu.matmul %0, %20, %cst_20 {dimension_numbers = #tpu.dot_dimension_numbers<[1], [0], [0], [1], [0, 0, 1, 1], [], []>} : vector<32x32xf32>, vector<32x128xf32>, vector<32x128xf32> -> vector<32x128xf32>
    %22 = vector.broadcast %4 : vector<32x1xf32> to vector<32x128xf32>
    %23 = arith.addf %21, %22 : vector<32x128xf32>
    %cst_21 = arith.constant 0.000000e+00 : f32
    %24 = vector.broadcast %cst_21 : f32 to vector<32x128xf32>
    %25 = arith.maximumf %23, %24 : vector<32x128xf32>
    %26 = vector.extract_strided_slice %25 {offsets = [0, 0], sizes = [16, 128], strides = [1, 1]} : vector<32x128xf32> to vector<16x128xf32>
    %27 = vector.extract_strided_slice %25 {offsets = [16, 0], sizes = [16, 128], strides = [1, 1]} : vector<32x128xf32> to vector<16x128xf32>
    %28 = arith.mulf %26, %26 : vector<16x128xf32>
    %29 = arith.mulf %27, %27 : vector<16x128xf32>
    %30 = arith.addf %28, %29 : vector<16x128xf32>
    %31 = math.sqrt %30 : vector<16x128xf32>
    %cst_22 = arith.constant dense<0.000000e+00> : vector<2x128xf32>
    %32 = tpu.matmul %5, %31, %cst_22 {dimension_numbers = #tpu.dot_dimension_numbers<[1], [0], [0], [1], [0, 0, 1, 1], [], []>} : vector<2x16xf32>, vector<16x128xf32>, vector<2x128xf32> -> vector<2x128xf32>
    %33 = vector.broadcast %6 : vector<2x1xf32> to vector<2x128xf32>
    %34 = arith.addf %32, %33 : vector<2x128xf32>
    %cst_23 = arith.constant 0.000000e+00 : f32
    %35 = vector.broadcast %cst_23 : f32 to vector<2x128xf32>
    %36 = arith.maximumf %34, %35 : vector<2x128xf32>
    %cst_24 = arith.constant dense<0xFF800000> : vector<128xf32>
    %37 = vector.multi_reduction <maximumf>, %36, %cst_24 [0] : vector<2x128xf32> to vector<128xf32>
    %38 = vector.shape_cast %37 : vector<128xf32> to vector<1x128xf32>
    %39 = vector.broadcast %38 : vector<1x128xf32> to vector<2x128xf32>
    %40 = arith.subf %36, %39 : vector<2x128xf32>
    %41 = math.exp %40 : vector<2x128xf32>
    %cst_25 = arith.constant dense<0.000000e+00> : vector<128xf32>
    %42 = vector.multi_reduction <add>, %41, %cst_25 [0] : vector<2x128xf32> to vector<128xf32>
    %43 = vector.shape_cast %42 : vector<128xf32> to vector<1x128xf32>
    %44 = math.log %43 : vector<1x128xf32>
    %45 = vector.broadcast %44 : vector<1x128xf32> to vector<2x128xf32>
    %46 = arith.subf %40, %45 : vector<2x128xf32>
    %c0_26 = arith.constant 0 : index
    %c0_27 = arith.constant 0 : index
    %47 = vector.load %arg9[%c0_26, %c0_27] : memref<2x128xf32, #tpu.memory_space<vmem>>, vector<2x128xf32>
    tpu.vector_store %arg9[%c0_26, %c0_27], %46 {strides = array<i32>} : memref<2x128xf32, #tpu.memory_space<vmem>>, vector<2x128xf32>,
    return
  }
  func.func @transform_0(%arg0: i32) -> (i32, i32) {
    %c0_i32 = arith.constant 0 : i32
    %c0_i32_0 = arith.constant 0 : i32
    return %c0_i32, %arg0 : i32, i32
  }
  func.func @transform_1(%arg0: i32) -> (i32, i32) {
    %c0_i32 = arith.constant 0 : i32
    %c0_i32_0 = arith.constant 0 : i32
    %c0_i32_1 = arith.constant 0 : i32
    return %c0_i32, %c0_i32_0 : i32, i32
  }
  func.func @transform_2(%arg0: i32) -> (i32, i32) {
    %c0_i32 = arith.constant 0 : i32
    %c0_i32_0 = arith.constant 0 : i32
    %c0_i32_1 = arith.constant 0 : i32
    return %c0_i32, %c0_i32_0 : i32, i32
  }
  func.func @transform_3(%arg0: i32) -> (i32, i32) {
    %c0_i32 = arith.constant 0 : i32
    %c0_i32_0 = arith.constant 0 : i32
    %c0_i32_1 = arith.constant 0 : i32
    return %c0_i32, %c0_i32_0 : i32, i32
  }
  func.func @transform_4(%arg0: i32) -> (i32, i32) {
    %c0_i32 = arith.constant 0 : i32
    %c0_i32_0 = arith.constant 0 : i32
    %c0_i32_1 = arith.constant 0 : i32
    return %c0_i32, %c0_i32_0 : i32, i32
  }
  func.func @transform_5(%arg0: i32) -> (i32, i32) {
    %c0_i32 = arith.constant 0 : i32
    %c0_i32_0 = arith.constant 0 : i32
    %c0_i32_1 = arith.constant 0 : i32
    return %c0_i32, %c0_i32_0 : i32, i32
  }
  func.func @transform_6(%arg0: i32) -> (i32, i32) {
    %c0_i32 = arith.constant 0 : i32
    %c0_i32_0 = arith.constant 0 : i32
    %c0_i32_1 = arith.constant 0 : i32
    return %c0_i32, %c0_i32_0 : i32, i32
  }
  func.func @transform_7(%arg0: i32) -> (i32, i32) {
    %c0_i32 = arith.constant 0 : i32
    %c0_i32_0 = arith.constant 0 : i32
    %c0_i32_1 = arith.constant 0 : i32
    return %c0_i32, %c0_i32_0 : i32, i32
  }
  func.func @transform_8(%arg0: i32) -> (i32, i32) {
    %c0_i32 = arith.constant 0 : i32
    %c0_i32_0 = arith.constant 0 : i32
    return %c0_i32, %arg0 : i32, i32
  }
}

</mosaic_0001>

<llo_original>
// kernel: neg.3
$region0: #{neg.3}
  #allocation0 [shape = 's32[1]{0}', space=sflag, size = 0x4, scoped, tag = 'scoped memory for neg.3']
  %s0 = inlined_call_operand.vmem [shape: f32[16,16], index: 0, kind: input, shape index: {}]
  %s1 = inlined_call_operand.vmem [shape: f32[16,16], index: 1, kind: output, shape index: {}]
  %v2 = vld [vmem:[%s0] sm:$0xff]
  %3 = xla_tuple %v2
  %4 = xla_tuple %3
  %v5 = vxor.u32 %v2, 2147483648
  %6 = xla_tuple %v5
  %7 = vst [vmem:[%s1] sm:$0xff] %v5
  %s8 = scalar_lea.vmem %s0, 8
  %v9 = vld [vmem:[%s8] sm:$0xff]
  %10 = xla_tuple %v9
  %11 = xla_tuple %10
  %v12 = vxor.u32 %v9, 2147483648
  %13 = xla_tuple %v12
  %s14 = scalar_lea.vmem %s1, 8
  %15 = vst [vmem:[%s14] sm:$0xff] %v12

// kernel: gcn_forward.1
$region0: #{gcn_forward.1}
  #allocation0 [shape = 'u32[]', space=smem, size = 0x4, offset = 0x4, fixed_abs, tag = 'smem constant byte address 0x4 - core index']
  #allocation1 [shape = 'u32[144,128]{1,0:T(1,128)}', space=vmem, size = 0x12000, scoped, tag = 'internal scratch']
  %s0 = inlined_call_operand.vmem [shape: f32[32,128], index: 0, kind: input, shape index: {}]
  %s1 = inlined_call_operand.vmem [shape: f32[32,32], index: 1, kind: input, shape index: {}]
  %s2 = inlined_call_operand.vmem [shape: f32[320,64], index: 2, kind: input, shape index: {}]
  %s3 = inlined_call_operand.vmem [shape: f32[320,1], index: 3, kind: input, shape index: {}]
  %s4 = inlined_call_operand.vmem [shape: f32[64,320], index: 4, kind: input, shape index: {}]
  %s5 = inlined_call_operand.vmem [shape: f32[32,1], index: 5, kind: input, shape index: {}]
  %s6 = inlined_call_operand.vmem [shape: f32[2,16], index: 6, kind: input, shape index: {}]
  %s7 = inlined_call_operand.vmem [shape: f32[2,1], index: 7, kind: input, shape index: {}]
  %s8 = inlined_call_operand.vmem [shape: f32[2,128], index: 8, kind: output, shape index: {}]
  %s9 = sld [smem:[#allocation0]]
  $region42: #{gcn_forward.1} parent=0
    _
  %s11 = ssub.s32 1, %s9
  %s12 = scalar_select 0, %s11, %s9
  // Predicated region
  $region2: #{gcn_forward.1} parent=0 // pred_check
    _
  $region3: #{gcn_forward.1} parent=0 // pred_check_branch
    %14 = sbr.rel (0) target = $region5
  $region4: #{gcn_forward.1} parent=0 // pred_region
    _
  $region5: #{gcn_forward.1} parent=0 // pred_fallthru
    _
  // Predicated region
  $region6: #{gcn_forward.1} parent=0 // pred_check
    _
  $region7: #{gcn_forward.1} parent=0 // pred_check_branch
    %16 = sbr.rel (0) target = $region9
  $region8: #{gcn_forward.1} parent=0 // pred_region
    _
  $region9: #{gcn_forward.1} parent=0 // pred_fallthru
    _
  // Predicated region
  $region10: #{gcn_forward.1} parent=0 // pred_check
    _
  $region11: #{gcn_forward.1} parent=0 // pred_check_branch
    %18 = sbr.rel (0) target = $region13
  $region12: #{gcn_forward.1} parent=0 // pred_region
    _
  $region13: #{gcn_forward.1} parent=0 // pred_fallthru
    _
  // Predicated region
  $region14: #{gcn_forward.1} parent=0 // pred_check
    _
  $region15: #{gcn_forward.1} parent=0 // pred_check_branch
    %20 = sbr.rel (0) target = $region17
  $region16: #{gcn_forward.1} parent=0 // pred_region
    _
  $region17: #{gcn_forward.1} parent=0 // pred_fallthru
    _
  // Predicated region
  $region18: #{gcn_forward.1} parent=0 // pred_check
    _
  $region19: #{gcn_forward.1} parent=0 // pred_check_branch
    %22 = sbr.rel (0) target = $region21
  $region20: #{gcn_forward.1} parent=0 // pred_region
    _
  $region21: #{gcn_forward.1} parent=0 // pred_fallthru
    _
  // Predicated region
  $region22: #{gcn_forward.1} parent=0 // pred_check
    _
  $region23: #{gcn_forward.1} parent=0 // pred_check_branch
    %24 = sbr.rel (0) target = $region25
  $region24: #{gcn_forward.1} parent=0 // pred_region
    _
  $region25: #{gcn_forward.1} parent=0 // pred_fallthru
    _
  // Predicated region
  $region26: #{gcn_forward.1} parent=0 // pred_check
    _
  $region27: #{gcn_forward.1} parent=0 // pred_check_branch
    %26 = sbr.rel (0) target = $region29
  $region28: #{gcn_forward.1} parent=0 // pred_region
    _
  $region29: #{gcn_forward.1} parent=0 // pred_fallthru
    _
  // Predicated region
  $region30: #{gcn_forward.1} parent=0 // pred_check
    _
  $region31: #{gcn_forward.1} parent=0 // pred_check_branch
    %28 = sbr.rel (0) target = $region33
  $region32: #{gcn_forward.1} parent=0 // pred_region
    _
  $region33: #{gcn_forward.1} parent=0 // pred_fallthru
    _
  %v29 = vld [vmem:[%s1] sm:$0xff]
  %v30 = vld [vmem:[%s1 + $0x8] sm:$0xff]
  %v31 = vld [vmem:[%s1 + $0x10] sm:$0xff]
  %v32 = vld [vmem:[%s1 + $0x18] sm:$0xff]
  %v33 = vld [vmem:[%s2] sm:$0xff]
  %v34 = vld [vmem:[%s2 + $0x8] sm:$0xff]
  %v35 = vld [vmem:[%s2 + $0x10] sm:$0xff]
  %v36 = vld [vmem:[%s2 + $0x18] sm:$0xff]
  %v37 = vld [vmem:[%s2 + $0x20] sm:$0xff]
  %v38 = vld [vmem:[%s2 + $0x28] sm:$0xff]
  %v39 = vld [vmem:[%s2 + $0x30] sm:$0xff]
  %v40 = vld [vmem:[%s2 + $0x38] sm:$0xff]
  %v41 = vld [vmem:[%s2 + $0x40] sm:$0xff]
  %v42 = vld [vmem:[%s2 + $0x48] sm:$0xff]
  %v43 = vld [vmem:[%s2 + $0x50] sm:$0xff]
  %v44 = vld [vmem:[%s2 + $0x58] sm:$0xff]
  %v45 = vld [vmem:[%s2 + $0x60] sm:$0xff]
  %v46 = vld [vmem:[%s2 + $0x68] sm:$0xff]
  %v47 = vld [vmem:[%s2 + $0x70] sm:$0xff]
  %v48 = vld [vmem:[%s2 + $0x78] sm:$0xff]
  %v49 = vld [vmem:[%s2 + $0x80] sm:$0xff]
  %v50 = vld [vmem:[%s2 + $0x88] sm:$0xff]
  %v51 = vld [vmem:[%s2 + $0x90] sm:$0xff]
  %v52 = vld [vmem:[%s2 + $0x98] sm:$0xff]
  %v53 = vld [vmem:[%s2 + $0xa0] sm:$0xff]
  %v54 = vld [vmem:[%s2 + $0xa8] sm:$0xff]
  %v55 = vld [vmem:[%s2 + $0xb0] sm:$0xff]
  %v56 = vld [vmem:[%s2 + $0xb8] sm:$0xff]
  %v57 = vld [vmem:[%s2 + $0xc0] sm:$0xff]
  %v58 = vld [vmem:[%s2 + $0xc8] sm:$0xff]
  %v59 = vld [vmem:[%s2 + $0xd0] sm:$0xff]
  %v60 = vld [vmem:[%s2 + $0xd8] sm:$0xff]
  %v61 = vld [vmem:[%s2 + $0xe0] sm:$0xff]
  %v62 = vld [vmem:[%s2 + $0xe8] sm:$0xff]
  %v63 = vld [vmem:[%s2 + $0xf0] sm:$0xff]
  %v64 = vld [vmem:[%s2 + $0xf8] sm:$0xff]
  %v65 = vld [vmem:[%s2 + $0x100] sm:$0xff]
  %v66 = vld [vmem:[%s2 + $0x108] sm:$0xff]
  %v67 = vld [vmem:[%s2 + $0x110] sm:$0xff]
  %v68 = vld [vmem:[%s2 + $0x118] sm:$0xff]
  %v69 = vld [vmem:[%s2 + $0x120] sm:$0xff]
  %v70 = vld [vmem:[%s2 + $0x128] sm:$0xff]
  %v71 = vld [vmem:[%s2 + $0x130] sm:$0xff]
  %v72 = vld [vmem:[%s2 + $0x138] sm:$0xff]
  %v73 = vld [vmem:[%s3] sm:$0xff]
  %v74 = vld [vmem:[%s3 + $0x8] sm:$0xff]
  %v75 = vld [vmem:[%s3 + $0x10] sm:$0xff]
  %v76 = vld [vmem:[%s3 + $0x18] sm:$0xff]
  %v77 = vld [vmem:[%s3 + $0x20] sm:$0xff]
  %v78 = vld [vmem:[%s3 + $0x28] sm:$0xff]
  %v79 = vld [vmem:[%s3 + $0x30] sm:$0xff]
  %v80 = vld [vmem:[%s3 + $0x38] sm:$0xff]
  %v81 = vld [vmem:[%s3 + $0x40] sm:$0xff]
  %v82 = vld [vmem:[%s3 + $0x48] sm:$0xff]
  %v83 = vld [vmem:[%s3 + $0x50] sm:$0xff]
  %v84 = vld [vmem:[%s3 + $0x58] sm:$0xff]
  %v85 = vld [vmem:[%s3 + $0x60] sm:$0xff]
  %v86 = vld [vmem:[%s3 + $0x68] sm:$0xff]
  %v87 = vld [vmem:[%s3 + $0x70] sm:$0xff]
  %v88 = vld [vmem:[%s3 + $0x78] sm:$0xff]
  %v89 = vld [vmem:[%s3 + $0x80] sm:$0xff]
  %v90 = vld [vmem:[%s3 + $0x88] sm:$0xff]
  %v91 = vld [vmem:[%s3 + $0x90] sm:$0xff]
  %v92 = vld [vmem:[%s3 + $0x98] sm:$0xff]
  %v93 = vld [vmem:[%s3 + $0xa0] sm:$0xff]
  %v94 = vld [vmem:[%s3 + $0xa8] sm:$0xff]
  %v95 = vld [vmem:[%s3 + $0xb0] sm:$0xff]
  %v96 = vld [vmem:[%s3 + $0xb8] sm:$0xff]
  %v97 = vld [vmem:[%s3 + $0xc0] sm:$0xff]
  %v98 = vld [vmem:[%s3 + $0xc8] sm:$0xff]
  %v99 = vld [vmem:[%s3 + $0xd0] sm:$0xff]
  %v100 = vld [vmem:[%s3 + $0xd8] sm:$0xff]
  %v101 = vld [vmem:[%s3 + $0xe0] sm:$0xff]
  %v102 = vld [vmem:[%s3 + $0xe8] sm:$0xff]
  %v103 = vld [vmem:[%s3 + $0xf0] sm:$0xff]
  %v104 = vld [vmem:[%s3 + $0xf8] sm:$0xff]
  %v105 = vld [vmem:[%s3 + $0x100] sm:$0xff]
  %v106 = vld [vmem:[%s3 + $0x108] sm:$0xff]
  %v107 = vld [vmem:[%s3 + $0x110] sm:$0xff]
  %v108 = vld [vmem:[%s3 + $0x118] sm:$0xff]
  %v109 = vld [vmem:[%s3 + $0x120] sm:$0xff]
  %v110 = vld [vmem:[%s3 + $0x128] sm:$0xff]
  %v111 = vld [vmem:[%s3 + $0x130] sm:$0xff]
  %v112 = vld [vmem:[%s3 + $0x138] sm:$0xff]
  %v113 = vld [vmem:[%s4] sm:$0xff]
  %v114 = vld [vmem:[%s4 + $0x8] sm:$0xff]
  %v115 = vld [vmem:[%s4 + $0x10] sm:$0xff]
  %v116 = vld [vmem:[%s4 + $0x18] sm:$0xff]
  %v117 = vld [vmem:[%s4 + $0x20] sm:$0xff]
  %v118 = vld [vmem:[%s4 + $0x28] sm:$0xff]
  %v119 = vld [vmem:[%s4 + $0x30] sm:$0xff]
  %v120 = vld [vmem:[%s4 + $0x38] sm:$0xff]
  %v121 = vld [vmem:[%s4 + $0x40] sm:$0xff]
  %v122 = vld [vmem:[%s4 + $0x48] sm:$0xff]
  %v123 = vld [vmem:[%s4 + $0x50] sm:$0xff]
  %v124 = vld [vmem:[%s4 + $0x58] sm:$0xff]
  %v125 = vld [vmem:[%s4 + $0x60] sm:$0xff]
  %v126 = vld [vmem:[%s4 + $0x68] sm:$0xff]
  %v127 = vld [vmem:[%s4 + $0x70] sm:$0xff]
  %v128 = vld [vmem:[%s4 + $0x78] sm:$0xff]
  %v129 = vld [vmem:[%s4 + $0x80] sm:$0xff]
  %v130 = vld [vmem:[%s4 + $0x88] sm:$0xff]
  %v131 = vld [vmem:[%s4 + $0x90] sm:$0xff]
  %v132 = vld [vmem:[%s4 + $0x98] sm:$0xff]
  %v133 = vld [vmem:[%s4 + $0xa0] sm:$0xff]
  %v134 = vld [vmem:[%s4 + $0xa8] sm:$0xff]
  %v135 = vld [vmem:[%s4 + $0xb0] sm:$0xff]
  %v136 = vld [vmem:[%s4 + $0xb8] sm:$0xff]
  %v137 = vld [vmem:[%s5] sm:$0xff]
  %v138 = vld [vmem:[%s5 + $0x8] sm:$0xff]
  %v139 = vld [vmem:[%s5 + $0x10] sm:$0xff]
  %v140 = vld [vmem:[%s5 + $0x18] sm:$0xff]
  %v141 = vld [vmem:[%s6] sm:$0x3]
  %v142 = vld [vmem:[%s7] sm:$0x3]
  %v143 = vld [vmem:[%s0] sm:$0xff]
  %v144 = vld [vmem:[%s0 + $0x8] sm:$0xff]
  %v145 = vld [vmem:[%s0 + $0x10] sm:$0xff]
  %v146 = vld [vmem:[%s0 + $0x18] sm:$0xff]
  %vm147 = vcmask 261120
  %v149 = vsel %vm147, %v29, 0
  %v152 = vsel %vm147, %v30, 0
  %v155 = vsel %vm147, %v31, 0
  %v158 = vsel %vm147, %v32, 0
  %160 = vmatprep.subr.mxu0 0.0
  %161 = vmatpush1.msra.mxu0 0.0
  %162 = vmatprep.subr.mxu0 0.0
  %163 = vmatpush1.msra.mxu0 0.0
  %164 = vmatprep.subr.mxu0 0.0
  %165 = vmatpush1.msra.mxu0 0.0
  %166 = vmatprep.subr.mxu0 0.0
  %167 = vmatpush1.msra.mxu0 0.0
  %168 = vmatprep.subr.mxu0 0.0
  %169 = vmatpush1.msra.mxu0 0.0
  %170 = vmatprep.subr.mxu0 0.0
  %171 = vmatpush1.msra.mxu0 0.0
  %172 = vmatprep.subr.mxu0 0.0
  %173 = vmatpush1.msra.mxu0 0.0
  %174 = vmatprep.subr.mxu0 0.0
  %175 = vmatpush1.msra.mxu0 0.0
  %176 = vmatprep.subr.mxu0 0.0
  %177 = vmatpush1.msra.mxu0 0.0
  %178 = vmatprep.subr.mxu0 0.0
  %179 = vmatpush1.msra.mxu0 0.0
  %180 = vmatprep.subr.mxu0 0.0
  %181 = vmatpush1.msra.mxu0 0.0
  %182 = vmatprep.subr.mxu0 0.0
  %183 = vmatpush1.msra.mxu0 0.0
  %184 = vmatprep.subr.mxu0 0.0
  %185 = vmatpush1.msra.mxu0 %v146
  %186 = vmatprep.subr.mxu0 0.0
  %187 = vmatpush1.msra.mxu0 %v145
  %188 = vmatprep.subr.mxu0 0.0
  %189 = vmatpush1.msra.mxu0 %v144
  %190 = vmatprep.subr.mxu0 0.0
  %191 = vmatpush1.msra.mxu0 %v143
  %192 = vmatprep.subr.mxu0 0.0
  %193 = vmatpush2.msra.mxu0 0.0
  %194 = vmatprep.subr.mxu0 0.0
  %195 = vmatpush2.msra.mxu0 0.0
  %196 = vmatprep.subr.mxu0 0.0
  %197 = vmatpush2.msra.mxu0 0.0
  %198 = vmatprep.subr.mxu0 0.0
  %199 = vmatpush2.msra.mxu0 0.0
  %200 = vmatprep.subr.mxu0 0.0
  %201 = vmatpush2.msra.mxu0 0.0
  %202 = vmatprep.subr.mxu0 0.0
  %203 = vmatpush2.msra.mxu0 0.0
  %204 = vmatprep.subr.mxu0 0.0
  %205 = vmatpush2.msra.mxu0 0.0
  %206 = vmatprep.subr.mxu0 0.0
  %207 = vmatpush2.msra.mxu0 0.0
  %208 = vmatprep.subr.mxu0 0.0
  %209 = vmatpush2.msra.mxu0 0.0
  %210 = vmatprep.subr.mxu0 0.0
  %211 = vmatpush2.msra.mxu0 0.0
  %212 = vmatprep.subr.mxu0 0.0
  %213 = vmatpush2.msra.mxu0 0.0
  %214 = vmatprep.subr.mxu0 0.0
  %215 = vmatpush2.msra.mxu0 0.0
  %216 = vmatprep.subr.mxu0 0.0
  %217 = vmatpush2.msra.mxu0 0.0
  %218 = vmatprep.subr.mxu0 0.0
  %219 = vmatpush2.msra.mxu0 0.0
  %220 = vmatprep.subr.mxu0 0.0
  %221 = vmatpush2.msra.mxu0 0.0
  %222 = vmatprep.subr.mxu0 0.0
  %223 = vmatpush2.msra.mxu0 0.0
  %224 = vmatprep.mubr.f32.mxu0 0.0
  %225 = vmatmul.mubr.f32.gmra.mxu0 %v149
  %v226 = vpop.f32.mrf.mxu0
  %v227 = vadd.f32 0.0, %v226
  %v228 = vpop.f32.mrf.mxu0
  %229 = vmatprep.mubr.f32.mxu0 0.0
  %230 = vmatmul.mubr.f32.gmra.mxu0 %v152
  %v231 = vpop.f32.mrf.mxu0
  %v232 = vadd.f32 0.0, %v231
  %v233 = vpop.f32.mrf.mxu0
  %234 = vmatprep.mubr.f32.mxu0 0.0
  %235 = vmatmul.mubr.f32.gmra.mxu0 %v155
  %v236 = vpop.f32.mrf.mxu0
  %v237 = vadd.f32 0.0, %v236
  %v238 = vpop.f32.mrf.mxu0
  %239 = vmatprep.mubr.f32.mxu0 0.0
  %240 = vmatmul.mubr.f32.gmra.mxu0 %v158
  %v241 = vpop.f32.mrf.mxu0
  %v242 = vadd.f32 0.0, %v241
  %v243 = vpop.f32.mrf.mxu0
  %244 = vdwg.mxu0
  %245 = vmatprep.subr.mxu0 0.0
  %246 = vmatpush1.msra.mxu0 0.0
  %247 = vmatprep.subr.mxu0 0.0
  %248 = vmatpush1.msra.mxu0 0.0
  %249 = vmatprep.subr.mxu0 0.0
  %250 = vmatpush1.msra.mxu0 0.0
  %251 = vmatprep.subr.mxu0 0.0
  %252 = vmatpush1.msra.mxu0 0.0
  %253 = vmatprep.subr.mxu0 0.0
  %254 = vmatpush1.msra.mxu0 0.0
  %255 = vmatprep.subr.mxu0 0.0
  %256 = vmatpush1.msra.mxu0 0.0
  %257 = vmatprep.subr.mxu0 0.0
  %258 = vmatpush1.msra.mxu0 0.0
  %259 = vmatprep.subr.mxu0 0.0
  %260 = vmatpush1.msra.mxu0 0.0
  %261 = vmatprep.subr.mxu0 0.0
  %262 = vmatpush1.msra.mxu0 0.0
  %263 = vmatprep.subr.mxu0 0.0
  %264 = vmatpush1.msra.mxu0 0.0
  %265 = vmatprep.subr.mxu0 0.0
  %266 = vmatpush1.msra.mxu0 0.0
  %267 = vmatprep.subr.mxu0 0.0
  %268 = vmatpush1.msra.mxu0 0.0
  %269 = vmatprep.subr.mxu0 0.0
  %270 = vmatpush1.msra.mxu0 %v242
  %271 = vmatprep.subr.mxu0 0.0
  %272 = vmatpush1.msra.mxu0 %v237
  %273 = vmatprep.subr.mxu0 0.0
  %274 = vmatpush1.msra.mxu0 %v232
  %275 = vmatprep.subr.mxu0 0.0
  %276 = vmatpush1.msra.mxu0 %v227
  %277 = vmatprep.subr.mxu0 0.0
  %278 = vmatpush2.msra.mxu0 0.0
  %279 = vmatprep.subr.mxu0 0.0
  %280 = vmatpush2.msra.mxu0 0.0
  %281 = vmatprep.subr.mxu0 0.0
  %282 = vmatpush2.msra.mxu0 0.0
  %283 = vmatprep.subr.mxu0 0.0
  %284 = vmatpush2.msra.mxu0 0.0
  %285 = vmatprep.subr.mxu0 0.0
  %286 = vmatpush2.msra.mxu0 0.0
  %287 = vmatprep.subr.mxu0 0.0
  %288 = vmatpush2.msra.mxu0 0.0
  %289 = vmatprep.subr.mxu0 0.0
  %290 = vmatpush2.msra.mxu0 0.0
  %291 = vmatprep.subr.mxu0 0.0
  %292 = vmatpush2.msra.mxu0 0.0
  %293 = vmatprep.subr.mxu0 0.0
  %294 = vmatpush2.msra.mxu0 0.0
  %295 = vmatprep.subr.mxu0 0.0
  %296 = vmatpush2.msra.mxu0 0.0
  %297 = vmatprep.subr.mxu0 0.0
  %298 = vmatpush2.msra.mxu0 0.0
  %299 = vmatprep.subr.mxu0 0.0
  %300 = vmatpush2.msra.mxu0 0.0
  %301 = vmatprep.subr.mxu0 0.0
  %302 = vmatpush2.msra.mxu0 0.0
  %303 = vmatprep.subr.mxu0 0.0
  %304 = vmatpush2.msra.mxu0 0.0
  %305 = vmatprep.subr.mxu0 0.0
  %306 = vmatpush2.msra.mxu0 0.0
  %307 = vmatprep.subr.mxu0 0.0
  %308 = vmatpush2.msra.mxu0 0.0
  %309 = vmatprep.mubr.f32.mxu0 0.0
  %310 = vmatmul.mubr.f32.gmra.mxu0 %v149
  %v311 = vpop.f32.mrf.mxu0
  %v312 = vadd.f32 0.0, %v311
  %v313 = vpop.f32.mrf.mxu0
  %314 = vmatprep.mubr.f32.mxu0 0.0
  %315 = vmatmul.mubr.f32.gmra.mxu0 %v152
  %v316 = vpop.f32.mrf.mxu0
  %v317 = vadd.f32 0.0, %v316
  %v318 = vpop.f32.mrf.mxu0
  %319 = vmatprep.mubr.f32.mxu0 0.0
  %320 = vmatmul.mubr.f32.gmra.mxu0 %v155
  %v321 = vpop.f32.mrf.mxu0
  %v322 = vadd.f32 0.0, %v321
  %v323 = vpop.f32.mrf.mxu0
  %324 = vmatprep.mubr.f32.mxu0 0.0
  %325 = vmatmul.mubr.f32.gmra.mxu0 %v158
  %v326 = vpop.f32.mrf.mxu0
  %v327 = vadd.f32 0.0, %v326
  %v328 = vpop.f32.mrf.mxu0
  %329 = vdwg.mxu0
  %331 = vset.pattern.permute.xlu0 0
  %332 = vperm.xlu0 %331, %v73
  %v333 = vpop.permute.xlu0 %332
  %336 = vset.pattern.permute.xlu0 0
  %337 = vperm.xlu0 %336, %v74
  %v338 = vpop.permute.xlu0 %337
  %341 = vset.pattern.permute.xlu0 0
  %342 = vperm.xlu0 %341, %v75
  %v343 = vpop.permute.xlu0 %342
  %346 = vset.pattern.permute.xlu0 0
  %347 = vperm.xlu0 %346, %v76
  %v348 = vpop.permute.xlu0 %347
  %351 = vset.pattern.permute.xlu0 0
  %352 = vperm.xlu0 %351, %v77
  %v353 = vpop.permute.xlu0 %352
  %356 = vset.pattern.permute.xlu0 0
  %357 = vperm.xlu0 %356, %v78
  %v358 = vpop.permute.xlu0 %357
  %361 = vset.pattern.permute.xlu0 0
  %362 = vperm.xlu0 %361, %v79
  %v363 = vpop.permute.xlu0 %362
  %366 = vset.pattern.permute.xlu0 0
  %367 = vperm.xlu0 %366, %v80
  %v368 = vpop.permute.xlu0 %367
  %371 = vset.pattern.permute.xlu0 0
  %372 = vperm.xlu0 %371, %v81
  %v373 = vpop.permute.xlu0 %372
  %376 = vset.pattern.permute.xlu0 0
  %377 = vperm.xlu0 %376, %v82
  %v378 = vpop.permute.xlu0 %377
  %381 = vset.pattern.permute.xlu0 0
  %382 = vperm.xlu0 %381, %v83
  %v383 = vpop.permute.xlu0 %382
  %386 = vset.pattern.permute.xlu0 0
  %387 = vperm.xlu0 %386, %v84
  %v388 = vpop.permute.xlu0 %387
  %391 = vset.pattern.permute.xlu0 0
  %392 = vperm.xlu0 %391, %v85
  %v393 = vpop.permute.xlu0 %392
  %396 = vset.pattern.permute.xlu0 0
  %397 = vperm.xlu0 %396, %v86
  %v398 = vpop.permute.xlu0 %397
  %401 = vset.pattern.permute.xlu0 0
  %402 = vperm.xlu0 %401, %v87
  %v403 = vpop.permute.xlu0 %402
  %406 = vset.pattern.permute.xlu0 0
  %407 = vperm.xlu0 %406, %v88
  %v408 = vpop.permute.xlu0 %407
  %411 = vset.pattern.permute.xlu0 0
  %412 = vperm.xlu0 %411, %v89
  %v413 = vpop.permute.xlu0 %412
  %416 = vset.pattern.permute.xlu0 0
  %417 = vperm.xlu0 %416, %v90
  %v418 = vpop.permute.xlu0 %417
  %421 = vset.pattern.permute.xlu0 0
  %422 = vperm.xlu0 %421, %v91
  %v423 = vpop.permute.xlu0 %422
  %426 = vset.pattern.permute.xlu0 0
  %427 = vperm.xlu0 %426, %v92
  %v428 = vpop.permute.xlu0 %427
  %431 = vset.pattern.permute.xlu0 0
  %432 = vperm.xlu0 %431, %v93
  %v433 = vpop.permute.xlu0 %432
  %436 = vset.pattern.permute.xlu0 0
  %437 = vperm.xlu0 %436, %v94
  %v438 = vpop.permute.xlu0 %437
  %441 = vset.pattern.permute.xlu0 0
  %442 = vperm.xlu0 %441, %v95
  %v443 = vpop.permute.xlu0 %442
  %446 = vset.pattern.permute.xlu0 0
  %447 = vperm.xlu0 %446, %v96
  %v448 = vpop.permute.xlu0 %447
  %451 = vset.pattern.permute.xlu0 0
  %452 = vperm.xlu0 %451, %v97
  %v453 = vpop.permute.xlu0 %452
  %456 = vset.pattern.permute.xlu0 0
  %457 = vperm.xlu0 %456, %v98
  %v458 = vpop.permute.xlu0 %457
  %461 = vset.pattern.permute.xlu0 0
  %462 = vperm.xlu0 %461, %v99
  %v463 = vpop.permute.xlu0 %462
  %466 = vset.pattern.permute.xlu0 0
  %467 = vperm.xlu0 %466, %v100
  %v468 = vpop.permute.xlu0 %467
  %471 = vset.pattern.permute.xlu0 0
  %472 = vperm.xlu0 %471, %v101
  %v473 = vpop.permute.xlu0 %472
  %476 = vset.pattern.permute.xlu0 0
  %477 = vperm.xlu0 %476, %v102
  %v478 = vpop.permute.xlu0 %477
  %481 = vset.pattern.permute.xlu0 0
  %482 = vperm.xlu0 %481, %v103
  %v483 = vpop.permute.xlu0 %482
  %486 = vset.pattern.permute.xlu0 0
  %487 = vperm.xlu0 %486, %v104
  %v488 = vpop.permute.xlu0 %487
  %491 = vset.pattern.permute.xlu0 0
  %492 = vperm.xlu0 %491, %v105
  %v493 = vpop.permute.xlu0 %492
  %496 = vset.pattern.permute.xlu0 0
  %497 = vperm.xlu0 %496, %v106
  %v498 = vpop.permute.xlu0 %497
  %501 = vset.pattern.permute.xlu0 0
  %502 = vperm.xlu0 %501, %v107
  %v503 = vpop.permute.xlu0 %502
  %506 = vset.pattern.permute.xlu0 0
  %507 = vperm.xlu0 %506, %v108
  %v508 = vpop.permute.xlu0 %507
  %511 = vset.pattern.permute.xlu0 0
  %512 = vperm.xlu0 %511, %v109
  %v513 = vpop.permute.xlu0 %512
  %516 = vset.pattern.permute.xlu0 0
  %517 = vperm.xlu0 %516, %v110
  %v518 = vpop.permute.xlu0 %517
  %521 = vset.pattern.permute.xlu0 0
  %522 = vperm.xlu0 %521, %v111
  %v523 = vpop.permute.xlu0 %522
  %526 = vset.pattern.permute.xlu0 0
  %527 = vperm.xlu0 %526, %v112
  %v528 = vpop.permute.xlu0 %527
  %vm530 = vcmask 523264
  %v532 = vsel %vm530, %v33, 0
  %v535 = vsel %vm530, %v34, 0
  %v538 = vsel %vm530, %v35, 0
  %v541 = vsel %vm530, %v36, 0
  %v544 = vsel %vm530, %v37, 0
  %v547 = vsel %vm530, %v38, 0
  %v550 = vsel %vm530, %v39, 0
  %v553 = vsel %vm530, %v40, 0
  %v556 = vsel %vm530, %v41, 0
  %v559 = vsel %vm530, %v42, 0
  %v562 = vsel %vm530, %v43, 0
  %v565 = vsel %vm530, %v44, 0
  %v568 = vsel %vm530, %v45, 0
  %v571 = vsel %vm530, %v46, 0
  %v574 = vsel %vm530, %v47, 0
  %v577 = vsel %vm530, %v48, 0
  %v580 = vsel %vm530, %v49, 0
  %v583 = vsel %vm530, %v50, 0
  %v586 = vsel %vm530, %v51, 0
  %v589 = vsel %vm530, %v52, 0
  %v592 = vsel %vm530, %v53, 0
  %v595 = vsel %vm530, %v54, 0
  %v598 = vsel %vm530, %v55, 0
  %v601 = vsel %vm530, %v56, 0
  %v604 = vsel %vm530, %v57, 0
  %v607 = vsel %vm530, %v58, 0
  %v610 = vsel %vm530, %v59, 0
  %v613 = vsel %vm530, %v60, 0
  %v616 = vsel %vm530, %v61, 0
  %v619 = vsel %vm530, %v62, 0
  %v622 = vsel %vm530, %v63, 0
  %v625 = vsel %vm530, %v64, 0
  %v628 = vsel %vm530, %v65, 0
  %v631 = vsel %vm530, %v66, 0
  %v634 = vsel %vm530, %v67, 0
  %v637 = vsel %vm530, %v68, 0
  %v640 = vsel %vm530, %v69, 0
  %v643 = vsel %vm530, %v70, 0
  %v646 = vsel %vm530, %v71, 0
  %v649 = vsel %vm530, %v72, 0
  %651 = vmatprep.subr.mxu0 0.0
  %652 = vmatpush1.msra.mxu0 0.0
  %653 = vmatprep.subr.mxu0 0.0
  %654 = vmatpush1.msra.mxu0 0.0
  %655 = vmatprep.subr.mxu0 0.0
  %656 = vmatpush1.msra.mxu0 0.0
  %657 = vmatprep.subr.mxu0 0.0
  %658 = vmatpush1.msra.mxu0 0.0
  %659 = vmatprep.subr.mxu0 0.0
  %660 = vmatpush1.msra.mxu0 0.0
  %661 = vmatprep.subr.mxu0 0.0
  %662 = vmatpush1.msra.mxu0 0.0
  %663 = vmatprep.subr.mxu0 0.0
  %664 = vmatpush1.msra.mxu0 0.0
  %665 = vmatprep.subr.mxu0 0.0
  %666 = vmatpush1.msra.mxu0 0.0
  %667 = vmatprep.subr.mxu0 0.0
  %668 = vmatpush1.msra.mxu0 %v327
  %669 = vmatprep.subr.mxu0 0.0
  %670 = vmatpush1.msra.mxu0 %v322
  %671 = vmatprep.subr.mxu0 0.0
  %672 = vmatpush1.msra.mxu0 %v317
  %673 = vmatprep.subr.mxu0 0.0
  %674 = vmatpush1.msra.mxu0 %v312
  %675 = vmatprep.subr.mxu0 0.0
  %676 = vmatpush1.msra.mxu0 %v242
  %677 = vmatprep.subr.mxu0 0.0
  %678 = vmatpush1.msra.mxu0 %v237
  %679 = vmatprep.subr.mxu0 0.0
  %680 = vmatpush1.msra.mxu0 %v232
  %681 = vmatprep.subr.mxu0 0.0
  %682 = vmatpush1.msra.mxu0 %v227
  %683 = vmatprep.subr.mxu0 0.0
  %684 = vmatpush2.msra.mxu0 0.0
  %685 = vmatprep.subr.mxu0 0.0
  %686 = vmatpush2.msra.mxu0 0.0
  %687 = vmatprep.subr.mxu0 0.0
  %688 = vmatpush2.msra.mxu0 0.0
  %689 = vmatprep.subr.mxu0 0.0
  %690 = vmatpush2.msra.mxu0 0.0
  %691 = vmatprep.subr.mxu0 0.0
  %692 = vmatpush2.msra.mxu0 0.0
  %693 = vmatprep.subr.mxu0 0.0
  %694 = vmatpush2.msra.mxu0 0.0
  %695 = vmatprep.subr.mxu0 0.0
  %696 = vmatpush2.msra.mxu0 0.0
  %697 = vmatprep.subr.mxu0 0.0
  %698 = vmatpush2.msra.mxu0 0.0
  %699 = vmatprep.subr.mxu0 0.0
  %700 = vmatpush2.msra.mxu0 0.0
  %701 = vmatprep.subr.mxu0 0.0
  %702 = vmatpush2.msra.mxu0 0.0
  %703 = vmatprep.subr.mxu0 0.0
  %704 = vmatpush2.msra.mxu0 0.0
  %705 = vmatprep.subr.mxu0 0.0
  %706 = vmatpush2.msra.mxu0 0.0
  %707 = vmatprep.subr.mxu0 0.0
  %708 = vmatpush2.msra.mxu0 0.0
  %709 = vmatprep.subr.mxu0 0.0
  %710 = vmatpush2.msra.mxu0 0.0
  %711 = vmatprep.subr.mxu0 0.0
  %712 = vmatpush2.msra.mxu0 0.0
  %713 = vmatprep.subr.mxu0 0.0
  %714 = vmatpush2.msra.mxu0 0.0
  %715 = vmatprep.mubr.f32.mxu0 0.0
  %716 = vmatmul.mubr.f32.gmra.mxu0 %v532
  %v717 = vpop.f32.mrf.mxu0
  %v718 = vadd.f32 %v333, %v717
  %v719 = vpop.f32.mrf.mxu0
  %720 = vmatprep.mubr.f32.mxu0 0.0
  %721 = vmatmul.mubr.f32.gmra.mxu0 %v535
  %v722 = vpop.f32.mrf.mxu0
  %v723 = vadd.f32 %v338, %v722
  %v724 = vpop.f32.mrf.mxu0
  %725 = vmatprep.mubr.f32.mxu0 0.0
  %726 = vmatmul.mubr.f32.gmra.mxu0 %v538
  %v727 = vpop.f32.mrf.mxu0
  %v728 = vadd.f32 %v343, %v727
  %v729 = vpop.f32.mrf.mxu0
  %730 = vmatprep.mubr.f32.mxu0 0.0
  %731 = vmatmul.mubr.f32.gmra.mxu0 %v541
  %v732 = vpop.f32.mrf.mxu0
  %v733 = vadd.f32 %v348, %v732
  %v734 = vpop.f32.mrf.mxu0
  %735 = vmatprep.mubr.f32.mxu0 0.0
  %736 = vmatmul.mubr.f32.gmra.mxu0 %v544
  %v737 = vpop.f32.mrf.mxu0
  %v738 = vadd.f32 %v353, %v737
  %v739 = vpop.f32.mrf.mxu0
  %740 = vmatprep.mubr.f32.mxu0 0.0
  %741 = vmatmul.mubr.f32.gmra.mxu0 %v547
  %v742 = vpop.f32.mrf.mxu0
  %v743 = vadd.f32 %v358, %v742
  %v744 = vpop.f32.mrf.mxu0
  %745 = vmatprep.mubr.f32.mxu0 0.0
  %746 = vmatmul.mubr.f32.gmra.mxu0 %v550
  %v747 = vpop.f32.mrf.mxu0
  %v748 = vadd.f32 %v363, %v747
  %v749 = vpop.f32.mrf.mxu0
  %750 = vmatprep.mubr.f32.mxu0 0.0
  %751 = vmatmul.mubr.f32.gmra.mxu0 %v553
  %v752 = vpop.f32.mrf.mxu0
  %v753 = vadd.f32 %v368, %v752
  %v754 = vpop.f32.mrf.mxu0
  %755 = vmatprep.mubr.f32.mxu0 0.0
  %756 = vmatmul.mubr.f32.gmra.mxu0 %v556
  %v757 = vpop.f32.mrf.mxu0
  %v758 = vadd.f32 %v373, %v757
  %v759 = vpop.f32.mrf.mxu0
  %760 = vmatprep.mubr.f32.mxu0 0.0
  %761 = vmatmul.mubr.f32.gmra.mxu0 %v559
  %v762 = vpop.f32.mrf.mxu0
  %v763 = vadd.f32 %v378, %v762
  %v764 = vpop.f32.mrf.mxu0
  %765 = vmatprep.mubr.f32.mxu0 0.0
  %766 = vmatmul.mubr.f32.gmra.mxu0 %v562
  %v767 = vpop.f32.mrf.mxu0
  %v768 = vadd.f32 %v383, %v767
  %v769 = vpop.f32.mrf.mxu0
  %770 = vmatprep.mubr.f32.mxu0 0.0
  %771 = vmatmul.mubr.f32.gmra.mxu0 %v565
  %v772 = vpop.f32.mrf.mxu0
  %v773 = vadd.f32 %v388, %v772
  %v774 = vpop.f32.mrf.mxu0
  %775 = vmatprep.mubr.f32.mxu0 0.0
  %776 = vmatmul.mubr.f32.gmra.mxu0 %v568
  %v777 = vpop.f32.mrf.mxu0
  %v778 = vadd.f32 %v393, %v777
  %v779 = vpop.f32.mrf.mxu0
  %780 = vmatprep.mubr.f32.mxu0 0.0
  %781 = vmatmul.mubr.f32.gmra.mxu0 %v571
  %v782 = vpop.f32.mrf.mxu0
  %v783 = vadd.f32 %v398, %v782
  %v784 = vpop.f32.mrf.mxu0
  %785 = vmatprep.mubr.f32.mxu0 0.0
  %786 = vmatmul.mubr.f32.gmra.mxu0 %v574
  %v787 = vpop.f32.mrf.mxu0
  %v788 = vadd.f32 %v403, %v787
  %v789 = vpop.f32.mrf.mxu0
  %790 = vmatprep.mubr.f32.mxu0 0.0
  %791 = vmatmul.mubr.f32.gmra.mxu0 %v577
  %v792 = vpop.f32.mrf.mxu0
  %v793 = vadd.f32 %v408, %v792
  %v794 = vpop.f32.mrf.mxu0
  %795 = vmatprep.mubr.f32.mxu0 0.0
  %796 = vmatmul.mubr.f32.gmra.mxu0 %v580
  %v797 = vpop.f32.mrf.mxu0
  %v798 = vadd.f32 %v413, %v797
  %v799 = vpop.f32.mrf.mxu0
  %800 = vmatprep.mubr.f32.mxu0 0.0
  %801 = vmatmul.mubr.f32.gmra.mxu0 %v583
  %v802 = vpop.f32.mrf.mxu0
  %v803 = vadd.f32 %v418, %v802
  %v804 = vpop.f32.mrf.mxu0
  %805 = vmatprep.mubr.f32.mxu0 0.0
  %806 = vmatmul.mubr.f32.gmra.mxu0 %v586
  %v807 = vpop.f32.mrf.mxu0
  %v808 = vadd.f32 %v423, %v807
  %v809 = vpop.f32.mrf.mxu0
  %810 = vmatprep.mubr.f32.mxu0 0.0
  %811 = vmatmul.mubr.f32.gmra.mxu0 %v589
  %v812 = vpop.f32.mrf.mxu0
  %v813 = vadd.f32 %v428, %v812
  %v814 = vpop.f32.mrf.mxu0
  %815 = vmatprep.mubr.f32.mxu0 0.0
  %816 = vmatmul.mubr.f32.gmra.mxu0 %v592
  %v817 = vpop.f32.mrf.mxu0
  %v818 = vadd.f32 %v433, %v817
  %v819 = vpop.f32.mrf.mxu0
  %820 = vmatprep.mubr.f32.mxu0 0.0
  %821 = vmatmul.mubr.f32.gmra.mxu0 %v595
  %v822 = vpop.f32.mrf.mxu0
  %v823 = vadd.f32 %v438, %v822
  %v824 = vpop.f32.mrf.mxu0
  %825 = vmatprep.mubr.f32.mxu0 0.0
  %826 = vmatmul.mubr.f32.gmra.mxu0 %v598
  %v827 = vpop.f32.mrf.mxu0
  %v828 = vadd.f32 %v443, %v827
  %v829 = vpop.f32.mrf.mxu0
  %830 = vmatprep.mubr.f32.mxu0 0.0
  %831 = vmatmul.mubr.f32.gmra.mxu0 %v601
  %v832 = vpop.f32.mrf.mxu0
  %v833 = vadd.f32 %v448, %v832
  %v834 = vpop.f32.mrf.mxu0
  %835 = vmatprep.mubr.f32.mxu0 0.0
  %836 = vmatmul.mubr.f32.gmra.mxu0 %v604
  %v837 = vpop.f32.mrf.mxu0
  %v838 = vadd.f32 %v453, %v837
  %v839 = vpop.f32.mrf.mxu0
  %840 = vmatprep.mubr.f32.mxu0 0.0
  %841 = vmatmul.mubr.f32.gmra.mxu0 %v607
  %v842 = vpop.f32.mrf.mxu0
  %v843 = vadd.f32 %v458, %v842
  %v844 = vpop.f32.mrf.mxu0
  %845 = vmatprep.mubr.f32.mxu0 0.0
  %846 = vmatmul.mubr.f32.gmra.mxu0 %v610
  %v847 = vpop.f32.mrf.mxu0
  %v848 = vadd.f32 %v463, %v847
  %v849 = vpop.f32.mrf.mxu0
  %850 = vmatprep.mubr.f32.mxu0 0.0
  %851 = vmatmul.mubr.f32.gmra.mxu0 %v613
  %v852 = vpop.f32.mrf.mxu0
  %v853 = vadd.f32 %v468, %v852
  %v854 = vpop.f32.mrf.mxu0
  %855 = vmatprep.mubr.f32.mxu0 0.0
  %856 = vmatmul.mubr.f32.gmra.mxu0 %v616
  %v857 = vpop.f32.mrf.mxu0
  %v858 = vadd.f32 %v473, %v857
  %v859 = vpop.f32.mrf.mxu0
  %860 = vmatprep.mubr.f32.mxu0 0.0
  %861 = vmatmul.mubr.f32.gmra.mxu0 %v619
  %v862 = vpop.f32.mrf.mxu0
  %v863 = vadd.f32 %v478, %v862
  %v864 = vpop.f32.mrf.mxu0
  %865 = vmatprep.mubr.f32.mxu0 0.0
  %866 = vmatmul.mubr.f32.gmra.mxu0 %v622
  %v867 = vpop.f32.mrf.mxu0
  %v868 = vadd.f32 %v483, %v867
  %v869 = vpop.f32.mrf.mxu0
  %870 = vmatprep.mubr.f32.mxu0 0.0
  %871 = vmatmul.mubr.f32.gmra.mxu0 %v625
  %v872 = vpop.f32.mrf.mxu0
  %v873 = vadd.f32 %v488, %v872
  %v874 = vpop.f32.mrf.mxu0
  %875 = vmatprep.mubr.f32.mxu0 0.0
  %876 = vmatmul.mubr.f32.gmra.mxu0 %v628
  %v877 = vpop.f32.mrf.mxu0
  %v878 = vadd.f32 %v493, %v877
  %v879 = vpop.f32.mrf.mxu0
  %880 = vmatprep.mubr.f32.mxu0 0.0
  %881 = vmatmul.mubr.f32.gmra.mxu0 %v631
  %v882 = vpop.f32.mrf.mxu0
  %v883 = vadd.f32 %v498, %v882
  %v884 = vpop.f32.mrf.mxu0
  %885 = vmatprep.mubr.f32.mxu0 0.0
  %886 = vmatmul.mubr.f32.gmra.mxu0 %v634
  %v887 = vpop.f32.mrf.mxu0
  %v888 = vadd.f32 %v503, %v887
  %v889 = vpop.f32.mrf.mxu0
  %890 = vmatprep.mubr.f32.mxu0 0.0
  %891 = vmatmul.mubr.f32.gmra.mxu0 %v637
  %v892 = vpop.f32.mrf.mxu0
  %v893 = vadd.f32 %v508, %v892
  %v894 = vpop.f32.mrf.mxu0
  %895 = vmatprep.mubr.f32.mxu0 0.0
  %896 = vmatmul.mubr.f32.gmra.mxu0 %v640
  %v897 = vpop.f32.mrf.mxu0
  %v898 = vadd.f32 %v513, %v897
  %v899 = vpop.f32.mrf.mxu0
  %900 = vmatprep.mubr.f32.mxu0 0.0
  %901 = vmatmul.mubr.f32.gmra.mxu0 %v643
  %v902 = vpop.f32.mrf.mxu0
  %v903 = vadd.f32 %v518, %v902
  %v904 = vpop.f32.mrf.mxu0
  %905 = vmatprep.mubr.f32.mxu0 0.0
  %906 = vmatmul.mubr.f32.gmra.mxu0 %v646
  %v907 = vpop.f32.mrf.mxu0
  %v908 = vadd.f32 %v523, %v907
  %v909 = vpop.f32.mrf.mxu0
  %910 = vmatprep.mubr.f32.mxu0 0.0
  %911 = vmatmul.mubr.f32.gmra.mxu0 %v649
  %v912 = vpop.f32.mrf.mxu0
  %v913 = vadd.f32 %v528, %v912
  %v914 = vpop.f32.mrf.mxu0
  %915 = vdwg.mxu0
  %v916 = vmax.f32 %v718, 0.0
  %v917 = vmax.f32 %v723, 0.0
  %v918 = vmax.f32 %v728, 0.0
  %v919 = vmax.f32 %v733, 0.0
  %v920 = vmax.f32 %v738, 0.0
  %v921 = vmax.f32 %v743, 0.0
  %v922 = vmax.f32 %v748, 0.0
  %v923 = vmax.f32 %v753, 0.0
  %v924 = vmax.f32 %v758, 0.0
  %v925 = vmax.f32 %v763, 0.0
  %v926 = vmax.f32 %v768, 0.0
  %v927 = vmax.f32 %v773, 0.0
  %v928 = vmax.f32 %v778, 0.0
  %v929 = vmax.f32 %v783, 0.0
  %v930 = vmax.f32 %v788, 0.0
  %v931 = vmax.f32 %v793, 0.0
  %v932 = vmax.f32 %v798, 0.0
  %v933 = vmax.f32 %v803, 0.0
  %v934 = vmax.f32 %v808, 0.0
  %v935 = vmax.f32 %v813, 0.0
  %v936 = vmax.f32 %v818, 0.0
  %v937 = vmax.f32 %v823, 0.0
  %v938 = vmax.f32 %v828, 0.0
  %v939 = vmax.f32 %v833, 0.0
  %v940 = vmax.f32 %v838, 0.0
  %v941 = vmax.f32 %v843, 0.0
  %v942 = vmax.f32 %v848, 0.0
  %v943 = vmax.f32 %v853, 0.0
  %v944 = vmax.f32 %v858, 0.0
  %v945 = vmax.f32 %v863, 0.0
  %v946 = vmax.f32 %v868, 0.0
  %v947 = vmax.f32 %v873, 0.0
  %v948 = vmax.f32 %v878, 0.0
  %v949 = vmax.f32 %v883, 0.0
  %v950 = vmax.f32 %v888, 0.0
  %v951 = vmax.f32 %v893, 0.0
  %v952 = vmax.f32 %v898, 0.0
  %v953 = vmax.f32 %v903, 0.0
  %v954 = vmax.f32 %v908, 0.0
  %v955 = vmax.f32 %v913, 0.0
  %v957 = vsel %vm530, %v115, 0
  %v960 = vsel %vm530, %v118, 0
  %v963 = vsel %vm530, %v121, 0
  %v966 = vsel %vm530, %v124, 0
  %v969 = vsel %vm530, %v127, 0
  %v972 = vsel %vm530, %v130, 0
  %v975 = vsel %vm530, %v133, 0
  %v978 = vsel %vm530, %v136, 0
  %980 = vmatprep.subr.mxu0 0.0
  %981 = vmatpush1.msra.mxu0 %v931
  %982 = vmatprep.subr.mxu0 0.0
  %983 = vmatpush1.msra.mxu0 %v930
  %984 = vmatprep.subr.mxu0 0.0
  %985 = vmatpush1.msra.mxu0 %v929
  %986 = vmatprep.subr.mxu0 0.0
  %987 = vmatpush1.msra.mxu0 %v928
  %988 = vmatprep.subr.mxu0 0.0
  %989 = vmatpush1.msra.mxu0 %v927
  %990 = vmatprep.subr.mxu0 0.0
  %991 = vmatpush1.msra.mxu0 %v926
  %992 = vmatprep.subr.mxu0 0.0
  %993 = vmatpush1.msra.mxu0 %v925
  %994 = vmatprep.subr.mxu0 0.0
  %995 = vmatpush1.msra.mxu0 %v924
  %996 = vmatprep.subr.mxu0 0.0
  %997 = vmatpush1.msra.mxu0 %v923
  %998 = vmatprep.subr.mxu0 0.0
  %999 = vmatpush1.msra.mxu0 %v922
  %1000 = vmatprep.subr.mxu0 0.0
  %1001 = vmatpush1.msra.mxu0 %v921
  %1002 = vmatprep.subr.mxu0 0.0
  %1003 = vmatpush1.msra.mxu0 %v920
  %1004 = vmatprep.subr.mxu0 0.0
  %1005 = vmatpush1.msra.mxu0 %v919
  %1006 = vmatprep.subr.mxu0 0.0
  %1007 = vmatpush1.msra.mxu0 %v918
  %1008 = vmatprep.subr.mxu0 0.0
  %1009 = vmatpush1.msra.mxu0 %v917
  %1010 = vmatprep.subr.mxu0 0.0
  %1011 = vmatpush1.msra.mxu0 %v916
  %1012 = vmatprep.subr.mxu0 0.0
  %1013 = vmatpush2.msra.mxu0 %v947
  %1014 = vmatprep.subr.mxu0 0.0
  %1015 = vmatpush2.msra.mxu0 %v946
  %1016 = vmatprep.subr.mxu0 0.0
  %1017 = vmatpush2.msra.mxu0 %v945
  %1018 = vmatprep.subr.mxu0 0.0
  %1019 = vmatpush2.msra.mxu0 %v944
  %1020 = vmatprep.subr.mxu0 0.0
  %1021 = vmatpush2.msra.mxu0 %v943
  %1022 = vmatprep.subr.mxu0 0.0
  %1023 = vmatpush2.msra.mxu0 %v942
  %1024 = vmatprep.subr.mxu0 0.0
  %1025 = vmatpush2.msra.mxu0 %v941
  %1026 = vmatprep.subr.mxu0 0.0
  %1027 = vmatpush2.msra.mxu0 %v940
  %1028 = vmatprep.subr.mxu0 0.0
  %1029 = vmatpush2.msra.mxu0 %v939
  %1030 = vmatprep.subr.mxu0 0.0
  %1031 = vmatpush2.msra.mxu0 %v938
  %1032 = vmatprep.subr.mxu0 0.0
  %1033 = vmatpush2.msra.mxu0 %v937
  %1034 = vmatprep.subr.mxu0 0.0
  %1035 = vmatpush2.msra.mxu0 %v936
  %1036 = vmatprep.subr.mxu0 0.0
  %1037 = vmatpush2.msra.mxu0 %v935
  %1038 = vmatprep.subr.mxu0 0.0
  %1039 = vmatpush2.msra.mxu0 %v934
  %1040 = vmatprep.subr.mxu0 0.0
  %1041 = vmatpush2.msra.mxu0 %v933
  %1042 = vmatprep.subr.mxu0 0.0
  %1043 = vmatpush2.msra.mxu0 %v932
  %1044 = vmatprep.mubr.f32.mxu0 %v114
  %1045 = vmatmul.mubr.f32.gmra.mxu0 %v113
  %v1046 = vpop.f32.mrf.mxu0
  %v1047 = vadd.f32 0.0, %v1046
  %v1048 = vpop.f32.mrf.mxu0
  %1049 = vmatprep.mubr.f32.mxu0 %v117
  %1050 = vmatmul.mubr.f32.gmra.mxu0 %v116
  %v1051 = vpop.f32.mrf.mxu0
  %v1052 = vadd.f32 0.0, %v1051
  %v1053 = vpop.f32.mrf.mxu0
  %1054 = vmatprep.mubr.f32.mxu0 %v120
  %1055 = vmatmul.mubr.f32.gmra.mxu0 %v119
  %v1056 = vpop.f32.mrf.mxu0
  %v1057 = vadd.f32 0.0, %v1056
  %v1058 = vpop.f32.mrf.mxu0
  %1059 = vmatprep.mubr.f32.mxu0 %v123
  %1060 = vmatmul.mubr.f32.gmra.mxu0 %v122
  %v1061 = vpop.f32.mrf.mxu0
  %v1062 = vadd.f32 0.0, %v1061
  %v1063 = vpop.f32.mrf.mxu0
  %1064 = vmatprep.mubr.f32.mxu0 %v126
  %1065 = vmatmul.mubr.f32.gmra.mxu0 %v125
  %v1066 = vpop.f32.mrf.mxu0
  %v1067 = vadd.f32 0.0, %v1066
  %v1068 = vpop.f32.mrf.mxu0
  %1069 = vmatprep.mubr.f32.mxu0 %v129
  %1070 = vmatmul.mubr.f32.gmra.mxu0 %v128
  %v1071 = vpop.f32.mrf.mxu0
  %v1072 = vadd.f32 0.0, %v1071
  %v1073 = vpop.f32.mrf.mxu0
  %1074 = vmatprep.mubr.f32.mxu0 %v132
  %1075 = vmatmul.mubr.f32.gmra.mxu0 %v131
  %v1076 = vpop.f32.mrf.mxu0
  %v1077 = vadd.f32 0.0, %v1076
  %v1078 = vpop.f32.mrf.mxu0
  %1079 = vmatprep.mubr.f32.mxu0 %v135
  %1080 = vmatmul.mubr.f32.gmra.mxu0 %v134
  %v1081 = vpop.f32.mrf.mxu0
  %v1082 = vadd.f32 0.0, %v1081
  %v1083 = vpop.f32.mrf.mxu0
  %1084 = vdwg.mxu0
  %1085 = vmatprep.subr.mxu0 0.0
  %1086 = vmatpush1.msra.mxu0 0.0
  %1087 = vmatprep.subr.mxu0 0.0
  %1088 = vmatpush1.msra.mxu0 0.0
  %1089 = vmatprep.subr.mxu0 0.0
  %1090 = vmatpush1.msra.mxu0 0.0
  %1091 = vmatprep.subr.mxu0 0.0
  %1092 = vmatpush1.msra.mxu0 0.0
  %1093 = vmatprep.subr.mxu0 0.0
  %1094 = vmatpush1.msra.mxu0 0.0
  %1095 = vmatprep.subr.mxu0 0.0
  %1096 = vmatpush1.msra.mxu0 0.0
  %1097 = vmatprep.subr.mxu0 0.0
  %1098 = vmatpush1.msra.mxu0 0.0
  %1099 = vmatprep.subr.mxu0 0.0
  %1100 = vmatpush1.msra.mxu0 0.0
  %1101 = vmatprep.subr.mxu0 0.0
  %1102 = vmatpush1.msra.mxu0 %v955
  %1103 = vmatprep.subr.mxu0 0.0
  %1104 = vmatpush1.msra.mxu0 %v954
  %1105 = vmatprep.subr.mxu0 0.0
  %1106 = vmatpush1.msra.mxu0 %v953
  %1107 = vmatprep.subr.mxu0 0.0
  %1108 = vmatpush1.msra.mxu0 %v952
  %1109 = vmatprep.subr.mxu0 0.0
  %1110 = vmatpush1.msra.mxu0 %v951
  %1111 = vmatprep.subr.mxu0 0.0
  %1112 = vmatpush1.msra.mxu0 %v950
  %1113 = vmatprep.subr.mxu0 0.0
  %1114 = vmatpush1.msra.mxu0 %v949
  %1115 = vmatprep.subr.mxu0 0.0
  %1116 = vmatpush1.msra.mxu0 %v948
  %1117 = vmatprep.subr.mxu0 0.0
  %1118 = vmatpush2.msra.mxu0 0.0
  %1119 = vmatprep.subr.mxu0 0.0
  %1120 = vmatpush2.msra.mxu0 0.0
  %1121 = vmatprep.subr.mxu0 0.0
  %1122 = vmatpush2.msra.mxu0 0.0
  %1123 = vmatprep.subr.mxu0 0.0
  %1124 = vmatpush2.msra.mxu0 0.0
  %1125 = vmatprep.subr.mxu0 0.0
  %1126 = vmatpush2.msra.mxu0 0.0
  %1127 = vmatprep.subr.mxu0 0.0
  %1128 = vmatpush2.msra.mxu0 0.0
  %1129 = vmatprep.subr.mxu0 0.0
  %1130 = vmatpush2.msra.mxu0 0.0
  %1131 = vmatprep.subr.mxu0 0.0
  %1132 = vmatpush2.msra.mxu0 0.0
  %1133 = vmatprep.subr.mxu0 0.0
  %1134 = vmatpush2.msra.mxu0 0.0
  %1135 = vmatprep.subr.mxu0 0.0
  %1136 = vmatpush2.msra.mxu0 0.0
  %1137 = vmatprep.subr.mxu0 0.0
  %1138 = vmatpush2.msra.mxu0 0.0
  %1139 = vmatprep.subr.mxu0 0.0
  %1140 = vmatpush2.msra.mxu0 0.0
  %1141 = vmatprep.subr.mxu0 0.0
  %1142 = vmatpush2.msra.mxu0 0.0
  %1143 = vmatprep.subr.mxu0 0.0
  %1144 = vmatpush2.msra.mxu0 0.0
  %1145 = vmatprep.subr.mxu0 0.0
  %1146 = vmatpush2.msra.mxu0 0.0
  %1147 = vmatprep.subr.mxu0 0.0
  %1148 = vmatpush2.msra.mxu0 0.0
  %1149 = vmatprep.mubr.f32.mxu0 0.0
  %1150 = vmatmul.mubr.f32.gmra.mxu0 %v957
  %v1151 = vpop.f32.mrf.mxu0
  %v1152 = vadd.f32 %v1047, %v1151
  %v1153 = vpop.f32.mrf.mxu0
  %1154 = vmatprep.mubr.f32.mxu0 0.0
  %1155 = vmatmul.mubr.f32.gmra.mxu0 %v960
  %v1156 = vpop.f32.mrf.mxu0
  %v1157 = vadd.f32 %v1052, %v1156
  %v1158 = vpop.f32.mrf.mxu0
  %1159 = vmatprep.mubr.f32.mxu0 0.0
  %1160 = vmatmul.mubr.f32.gmra.mxu0 %v963
  %v1161 = vpop.f32.mrf.mxu0
  %v1162 = vadd.f32 %v1057, %v1161
  %v1163 = vpop.f32.mrf.mxu0
  %1164 = vmatprep.mubr.f32.mxu0 0.0
  %1165 = vmatmul.mubr.f32.gmra.mxu0 %v966
  %v1166 = vpop.f32.mrf.mxu0
  %v1167 = vadd.f32 %v1062, %v1166
  %v1168 = vpop.f32.mrf.mxu0
  %1169 = vmatprep.mubr.f32.mxu0 0.0
  %1170 = vmatmul.mubr.f32.gmra.mxu0 %v969
  %v1171 = vpop.f32.mrf.mxu0
  %v1172 = vadd.f32 %v1067, %v1171
  %v1173 = vpop.f32.mrf.mxu0
  %1174 = vmatprep.mubr.f32.mxu0 0.0
  %1175 = vmatmul.mubr.f32.gmra.mxu0 %v972
  %v1176 = vpop.f32.mrf.mxu0
  %v1177 = vadd.f32 %v1072, %v1176
  %v1178 = vpop.f32.mrf.mxu0
  %1179 = vmatprep.mubr.f32.mxu0 0.0
  %1180 = vmatmul.mubr.f32.gmra.mxu0 %v975
  %v1181 = vpop.f32.mrf.mxu0
  %v1182 = vadd.f32 %v1077, %v1181
  %v1183 = vpop.f32.mrf.mxu0
  %1184 = vmatprep.mubr.f32.mxu0 0.0
  %1185 = vmatmul.mubr.f32.gmra.mxu0 %v978
  %v1186 = vpop.f32.mrf.mxu0
  %v1187 = vadd.f32 %v1082, %v1186
  %v1188 = vpop.f32.mrf.mxu0
  %1189 = vdwg.mxu0
  %1190 = vmatprep.subr.mxu0 0.0
  %1191 = vmatpush1.msra.mxu0 0.0
  %1192 = vmatprep.subr.mxu0 0.0
  %1193 = vmatpush1.msra.mxu0 0.0
  %1194 = vmatprep.subr.mxu0 0.0
  %1195 = vmatpush1.msra.mxu0 0.0
  %1196 = vmatprep.subr.mxu0 0.0
  %1197 = vmatpush1.msra.mxu0 0.0
  %1198 = vmatprep.subr.mxu0 0.0
  %1199 = vmatpush1.msra.mxu0 0.0
  %1200 = vmatprep.subr.mxu0 0.0
  %1201 = vmatpush1.msra.mxu0 0.0
  %1202 = vmatprep.subr.mxu0 0.0
  %1203 = vmatpush1.msra.mxu0 0.0
  %1204 = vmatprep.subr.mxu0 0.0
  %1205 = vmatpush1.msra.mxu0 0.0
  %1206 = vmatprep.subr.mxu0 0.0
  %1207 = vmatpush1.msra.mxu0 0.0
  %1208 = vmatprep.subr.mxu0 0.0
  %1209 = vmatpush1.msra.mxu0 0.0
  %1210 = vmatprep.subr.mxu0 0.0
  %1211 = vmatpush1.msra.mxu0 0.0
  %1212 = vmatprep.subr.mxu0 0.0
  %1213 = vmatpush1.msra.mxu0 0.0
  %1214 = vmatprep.subr.mxu0 0.0
  %1215 = vmatpush1.msra.mxu0 %v1187
  %1216 = vmatprep.subr.mxu0 0.0
  %1217 = vmatpush1.msra.mxu0 %v1182
  %1218 = vmatprep.subr.mxu0 0.0
  %1219 = vmatpush1.msra.mxu0 %v1177
  %1220 = vmatprep.subr.mxu0 0.0
  %1221 = vmatpush1.msra.mxu0 %v1172
  %1222 = vmatprep.subr.mxu0 0.0
  %1223 = vmatpush2.msra.mxu0 0.0
  %1224 = vmatprep.subr.mxu0 0.0
  %1225 = vmatpush2.msra.mxu0 0.0
  %1226 = vmatprep.subr.mxu0 0.0
  %1227 = vmatpush2.msra.mxu0 0.0
  %1228 = vmatprep.subr.mxu0 0.0
  %1229 = vmatpush2.msra.mxu0 0.0
  %1230 = vmatprep.subr.mxu0 0.0
  %1231 = vmatpush2.msra.mxu0 0.0
  %1232 = vmatprep.subr.mxu0 0.0
  %1233 = vmatpush2.msra.mxu0 0.0
  %1234 = vmatprep.subr.mxu0 0.0
  %1235 = vmatpush2.msra.mxu0 0.0
  %1236 = vmatprep.subr.mxu0 0.0
  %1237 = vmatpush2.msra.mxu0 0.0
  %1238 = vmatprep.subr.mxu0 0.0
  %1239 = vmatpush2.msra.mxu0 0.0
  %1240 = vmatprep.subr.mxu0 0.0
  %1241 = vmatpush2.msra.mxu0 0.0
  %1242 = vmatprep.subr.mxu0 0.0
  %1243 = vmatpush2.msra.mxu0 0.0
  %1244 = vmatprep.subr.mxu0 0.0
  %1245 = vmatpush2.msra.mxu0 0.0
  %1246 = vmatprep.subr.mxu0 0.0
  %1247 = vmatpush2.msra.mxu0 0.0
  %1248 = vmatprep.subr.mxu0 0.0
  %1249 = vmatpush2.msra.mxu0 0.0
  %1250 = vmatprep.subr.mxu0 0.0
  %1251 = vmatpush2.msra.mxu0 0.0
  %1252 = vmatprep.subr.mxu0 0.0
  %1253 = vmatpush2.msra.mxu0 0.0
  %1254 = vmatprep.mubr.f32.mxu0 0.0
  %1255 = vmatmul.mubr.f32.gmra.mxu0 %v149
  %v1256 = vpop.f32.mrf.mxu0
  %v1257 = vadd.f32 0.0, %v1256
  %v1258 = vpop.f32.mrf.mxu0
  %1259 = vmatprep.mubr.f32.mxu0 0.0
  %1260 = vmatmul.mubr.f32.gmra.mxu0 %v152
  %v1261 = vpop.f32.mrf.mxu0
  %v1262 = vadd.f32 0.0, %v1261
  %v1263 = vpop.f32.mrf.mxu0
  %1264 = vmatprep.mubr.f32.mxu0 0.0
  %1265 = vmatmul.mubr.f32.gmra.mxu0 %v155
  %v1266 = vpop.f32.mrf.mxu0
  %v1267 = vadd.f32 0.0, %v1266
  %v1268 = vpop.f32.mrf.mxu0
  %1269 = vmatprep.mubr.f32.mxu0 0.0
  %1270 = vmatmul.mubr.f32.gmra.mxu0 %v158
  %v1271 = vpop.f32.mrf.mxu0
  %v1272 = vadd.f32 0.0, %v1271
  %v1273 = vpop.f32.mrf.mxu0
  %1274 = vdwg.mxu0
  %v1275 = vadd.f32 %v1152, %v1257
  %v1276 = vadd.f32 %v1157, %v1262
  %v1277 = vadd.f32 %v1162, %v1267
  %v1278 = vadd.f32 %v1167, %v1272
  %1280 = vset.pattern.permute.xlu0 0
  %1281 = vperm.xlu0 %1280, %v137
  %v1282 = vpop.permute.xlu0 %1281
  %1285 = vset.pattern.permute.xlu0 0
  %1286 = vperm.xlu0 %1285, %v138
  %v1287 = vpop.permute.xlu0 %1286
  %1290 = vset.pattern.permute.xlu0 0
  %1291 = vperm.xlu0 %1290, %v139
  %v1292 = vpop.permute.xlu0 %1291
  %1295 = vset.pattern.permute.xlu0 0
  %1296 = vperm.xlu0 %1295, %v140
  %v1297 = vpop.permute.xlu0 %1296
  %1299 = vmatprep.subr.mxu0 0.0
  %1300 = vmatpush1.msra.mxu0 0.0
  %1301 = vmatprep.subr.mxu0 0.0
  %1302 = vmatpush1.msra.mxu0 0.0
  %1303 = vmatprep.subr.mxu0 0.0
  %1304 = vmatpush1.msra.mxu0 0.0
  %1305 = vmatprep.subr.mxu0 0.0
  %1306 = vmatpush1.msra.mxu0 0.0
  %1307 = vmatprep.subr.mxu0 0.0
  %1308 = vmatpush1.msra.mxu0 0.0
  %1309 = vmatprep.subr.mxu0 0.0
  %1310 = vmatpush1.msra.mxu0 0.0
  %1311 = vmatprep.subr.mxu0 0.0
  %1312 = vmatpush1.msra.mxu0 0.0
  %1313 = vmatprep.subr.mxu0 0.0
  %1314 = vmatpush1.msra.mxu0 0.0
  %1315 = vmatprep.subr.mxu0 0.0
  %1316 = vmatpush1.msra.mxu0 0.0
  %1317 = vmatprep.subr.mxu0 0.0
  %1318 = vmatpush1.msra.mxu0 0.0
  %1319 = vmatprep.subr.mxu0 0.0
  %1320 = vmatpush1.msra.mxu0 0.0
  %1321 = vmatprep.subr.mxu0 0.0
  %1322 = vmatpush1.msra.mxu0 0.0
  %1323 = vmatprep.subr.mxu0 0.0
  %1324 = vmatpush1.msra.mxu0 %v1278
  %1325 = vmatprep.subr.mxu0 0.0
  %1326 = vmatpush1.msra.mxu0 %v1277
  %1327 = vmatprep.subr.mxu0 0.0
  %1328 = vmatpush1.msra.mxu0 %v1276
  %1329 = vmatprep.subr.mxu0 0.0
  %1330 = vmatpush1.msra.mxu0 %v1275
  %1331 = vmatprep.subr.mxu0 0.0
  %1332 = vmatpush2.msra.mxu0 0.0
  %1333 = vmatprep.subr.mxu0 0.0
  %1334 = vmatpush2.msra.mxu0 0.0
  %1335 = vmatprep.subr.mxu0 0.0
  %1336 = vmatpush2.msra.mxu0 0.0
  %1337 = vmatprep.subr.mxu0 0.0
  %1338 = vmatpush2.msra.mxu0 0.0
  %1339 = vmatprep.subr.mxu0 0.0
  %1340 = vmatpush2.msra.mxu0 0.0
  %1341 = vmatprep.subr.mxu0 0.0
  %1342 = vmatpush2.msra.mxu0 0.0
  %1343 = vmatprep.subr.mxu0 0.0
  %1344 = vmatpush2.msra.mxu0 0.0
  %1345 = vmatprep.subr.mxu0 0.0
  %1346 = vmatpush2.msra.mxu0 0.0
  %1347 = vmatprep.subr.mxu0 0.0
  %1348 = vmatpush2.msra.mxu0 0.0
  %1349 = vmatprep.subr.mxu0 0.0
  %1350 = vmatpush2.msra.mxu0 0.0
  %1351 = vmatprep.subr.mxu0 0.0
  %1352 = vmatpush2.msra.mxu0 0.0
  %1353 = vmatprep.subr.mxu0 0.0
  %1354 = vmatpush2.msra.mxu0 0.0
  %1355 = vmatprep.subr.mxu0 0.0
  %1356 = vmatpush2.msra.mxu0 0.0
  %1357 = vmatprep.subr.mxu0 0.0
  %1358 = vmatpush2.msra.mxu0 0.0
  %1359 = vmatprep.subr.mxu0 0.0
  %1360 = vmatpush2.msra.mxu0 0.0
  %1361 = vmatprep.subr.mxu0 0.0
  %1362 = vmatpush2.msra.mxu0 0.0
  %1363 = vmatprep.mubr.f32.mxu0 0.0
  %1364 = vmatmul.mubr.f32.gmra.mxu0 %v149
  %v1365 = vpop.f32.mrf.mxu0
  %v1366 = vadd.f32 %v1282, %v1365
  %v1367 = vpop.f32.mrf.mxu0
  %1368 = vmatprep.mubr.f32.mxu0 0.0
  %1369 = vmatmul.mubr.f32.gmra.mxu0 %v152
  %v1370 = vpop.f32.mrf.mxu0
  %v1371 = vadd.f32 %v1287, %v1370
  %v1372 = vpop.f32.mrf.mxu0
  %1373 = vmatprep.mubr.f32.mxu0 0.0
  %1374 = vmatmul.mubr.f32.gmra.mxu0 %v155
  %v1375 = vpop.f32.mrf.mxu0
  %v1376 = vadd.f32 %v1292, %v1375
  %v1377 = vpop.f32.mrf.mxu0
  %1378 = vmatprep.mubr.f32.mxu0 0.0
  %1379 = vmatmul.mubr.f32.gmra.mxu0 %v158
  %v1380 = vpop.f32.mrf.mxu0
  %v1381 = vadd.f32 %v1297, %v1380
  %v1382 = vpop.f32.mrf.mxu0
  %1383 = vdwg.mxu0
  %v1384 = vmax.f32 %v1366, 0.0
  %v1385 = vmax.f32 %v1371, 0.0
  %v1386 = vmax.f32 %v1376, 0.0
  %v1387 = vmax.f32 %v1381, 0.0
  %v1388 = vmul.f32 %v1384, %v1384
  %v1389 = vmul.f32 %v1385, %v1385
  %v1390 = vmul.f32 %v1386, %v1386
  %v1391 = vmul.f32 %v1387, %v1387
  %v1392 = vadd.f32 %v1388, %v1390
  %v1393 = vadd.f32 %v1389, %v1391
  %v1394 = vrsqrt.pop %v1392
  %v1395 = vmul.f32 %v1392, %v1394
  %vm1396 = vcmp.eq.f32.partialorder %v1392, inf
  %v1397 = vsel %vm1396, %v1392, %v1395
  %vm1398 = vcmp.eq.f32.partialorder %v1392, 0.0
  %v1399 = vand.u32 %v1392, 2147483648
  %v1400 = vsel %vm1398, %v1399, %v1397
  %v1401 = vrsqrt.pop %v1393
  %v1402 = vmul.f32 %v1393, %v1401
  %vm1403 = vcmp.eq.f32.partialorder %v1393, inf
  %v1404 = vsel %vm1403, %v1393, %v1402
  %vm1405 = vcmp.eq.f32.partialorder %v1393, 0.0
  %v1406 = vand.u32 %v1393, 2147483648
  %v1407 = vsel %vm1405, %v1406, %v1404
  %1409 = vset.pattern.permute.xlu0 0
  %1410 = vperm.xlu0 %1409, %v142
  %v1411 = vpop.permute.xlu0 %1410
  %vm1413 = vcmask 130048
  %v1415 = vsel %vm1413, %v141, 0
  %1417 = vmatprep.subr.mxu0 0.0
  %1418 = vmatpush1.msra.mxu0 0.0
  %1419 = vmatprep.subr.mxu0 0.0
  %1420 = vmatpush1.msra.mxu0 0.0
  %1421 = vmatprep.subr.mxu0 0.0
  %1422 = vmatpush1.msra.mxu0 0.0
  %1423 = vmatprep.subr.mxu0 0.0
  %1424 = vmatpush1.msra.mxu0 0.0
  %1425 = vmatprep.subr.mxu0 0.0
  %1426 = vmatpush1.msra.mxu0 0.0
  %1427 = vmatprep.subr.mxu0 0.0
  %1428 = vmatpush1.msra.mxu0 0.0
  %1429 = vmatprep.subr.mxu0 0.0
  %1430 = vmatpush1.msra.mxu0 0.0
  %1431 = vmatprep.subr.mxu0 0.0
  %1432 = vmatpush1.msra.mxu0 0.0
  %1433 = vmatprep.subr.mxu0 0.0
  %1434 = vmatpush1.msra.mxu0 0.0
  %1435 = vmatprep.subr.mxu0 0.0
  %1436 = vmatpush1.msra.mxu0 0.0
  %1437 = vmatprep.subr.mxu0 0.0
  %1438 = vmatpush1.msra.mxu0 0.0
  %1439 = vmatprep.subr.mxu0 0.0
  %1440 = vmatpush1.msra.mxu0 0.0
  %1441 = vmatprep.subr.mxu0 0.0
  %1442 = vmatpush1.msra.mxu0 0.0
  %1443 = vmatprep.subr.mxu0 0.0
  %1444 = vmatpush1.msra.mxu0 0.0
  %1445 = vmatprep.subr.mxu0 0.0
  %1446 = vmatpush1.msra.mxu0 %v1407
  %1447 = vmatprep.subr.mxu0 0.0
  %1448 = vmatpush1.msra.mxu0 %v1400
  %1449 = vmatprep.subr.mxu0 0.0
  %1450 = vmatpush2.msra.mxu0 0.0
  %1451 = vmatprep.subr.mxu0 0.0
  %1452 = vmatpush2.msra.mxu0 0.0
  %1453 = vmatprep.subr.mxu0 0.0
  %1454 = vmatpush2.msra.mxu0 0.0
  %1455 = vmatprep.subr.mxu0 0.0
  %1456 = vmatpush2.msra.mxu0 0.0
  %1457 = vmatprep.subr.mxu0 0.0
  %1458 = vmatpush2.msra.mxu0 0.0
  %1459 = vmatprep.subr.mxu0 0.0
  %1460 = vmatpush2.msra.mxu0 0.0
  %1461 = vmatprep.subr.mxu0 0.0
  %1462 = vmatpush2.msra.mxu0 0.0
  %1463 = vmatprep.subr.mxu0 0.0
  %1464 = vmatpush2.msra.mxu0 0.0
  %1465 = vmatprep.subr.mxu0 0.0
  %1466 = vmatpush2.msra.mxu0 0.0
  %1467 = vmatprep.subr.mxu0 0.0
  %1468 = vmatpush2.msra.mxu0 0.0
  %1469 = vmatprep.subr.mxu0 0.0
  %1470 = vmatpush2.msra.mxu0 0.0
  %1471 = vmatprep.subr.mxu0 0.0
  %1472 = vmatpush2.msra.mxu0 0.0
  %1473 = vmatprep.subr.mxu0 0.0
  %1474 = vmatpush2.msra.mxu0 0.0
  %1475 = vmatprep.subr.mxu0 0.0
  %1476 = vmatpush2.msra.mxu0 0.0
  %1477 = vmatprep.subr.mxu0 0.0
  %1478 = vmatpush2.msra.mxu0 0.0
  %1479 = vmatprep.subr.mxu0 0.0
  %1480 = vmatpush2.msra.mxu0 0.0
  %1481 = vmatprep.mubr.f32.mxu0 0.0
  %1482 = vmatmul.mubr.f32.gmra.mxu0 %v1415
  %v1483 = vpop.f32.mrf.mxu0
  %v1484 = vadd.f32 %v1411, %v1483
  %v1485 = vpop.f32.mrf.mxu0
  %1486 = vdwg.mxu0
  %v1487 = vmax.f32 %v1484, 0.0
  %vm1488 = vcmask 1041408
  %v1489 = vsel %vm1488, %v1487, -inf
  %v1490 = vrot.slane %v1489, 4
  %v1491 = vmax.f32 %v1489, %v1490
  %v1492 = vrot.slane %v1491, 2
  %v1493 = vmax.f32 %v1491, %v1492
  %v1494 = vrot.slane %v1493, 1
  %v1495 = vmax.f32 %v1493, %v1494
  %v1496 = vsub.f32 %v1487, %v1495
  %v1497 = vmul.f32 %v1496, 1.442695
  %v1498 = vpow.pop %v1497
  %v1499 = vsel %vm1488, %v1498, 0.0
  %v1500 = vrot.slane %v1499, 4
  %v1501 = vadd.f32 %v1499, %v1500
  %v1502 = vrot.slane %v1501, 2
  %v1503 = vadd.f32 %v1501, %v1502
  %v1504 = vrot.slane %v1503, 1
  %v1505 = vadd.f32 %v1503, %v1504
  %v1506 = vlog2.pop %v1505
  %v1507 = vmul.f32 %v1506, 0.6931472
  %v1508 = vsub.f32 %v1496, %v1507
  %1509 = vst [vmem:[%s8] sm:$0x3] %v1508
  // Predicated region
  $region34: #{gcn_forward.1} parent=0 // pred_check
    _
  $region35: #{gcn_forward.1} parent=0 // pred_check_branch
    %1511 = sbr.rel (0) target = $region37
  $region36: #{gcn_forward.1} parent=0 // pred_region
    _
  $region37: #{gcn_forward.1} parent=0 // pred_fallthru
    _
  // Predicated region
  $region38: #{gcn_forward.1} parent=0 // pred_check
    _
  $region39: #{gcn_forward.1} parent=0 // pred_check_branch
    %1513 = sbr.rel (0) target = $region41
  $region40: #{gcn_forward.1} parent=0 // pred_region
    _
  $region41: #{gcn_forward.1} parent=0 // pred_fallthru
    _

</llo_original>
